<compile_context>
chip_gen: v5e
topology: v5e:2x2
jax: 0.10.0
libtpu: 0.0.40
codegen_flags: <defaults>
</compile_context>

<pallas_src>
import jax
import jax.numpy as jnp
from jax.experimental import pallas as pl
from jax.experimental.pallas import tpu as pltpu

_BN_EPS = 1e-5


# ----------------------------------------------------------------------------
# Fused kernel: BN1 -> ReLU -> 1x1 conv -> (+b2) -> ReLU -> 3x3 conv (pad=1)
#               -> concat([x, conv], channel).   One image per grid step.
# ----------------------------------------------------------------------------
def _build_kernel(H, W, cin, cmid, cout, OFF, TAIL):
    HW = H * W
    ctot = cin + cout
    ninec = 9 * cout

    def kernel(x_ref, s1_ref, b1_ref, w1_ref, b2_ref, w2_ref,
               lmask_ref, rmask_ref, o_ref, m_ref):
        # x_ref  : (1, HW, Cin) f32          s1/b1 : (1, Cin) f32
        # w1_ref : (Cin, Cmid) bf16 (BN2 scale already folded in)
        # b2_ref : (1, Cmid) f32
        # w2_ref : (Cmid, 9*Cout) bf16 (tap t = dy*3+dx in cols [t*Cout,(t+1)*Cout))
        # lmask/rmask : (HW, 1) f32 column-boundary masks (x==0 / x==W-1)
        # o_ref  : (1, HW, Cin+Cout) f32     m_ref : (OFF+HW+TAIL, 9*Cout) f32 scratch
        x = x_ref[0]                                              # (HW, Cin) f32

        # ---- Identity branch of the dense connection (concat fused) ----
        o_ref[0, :, 0:cin] = x

        # ---- BN1 -> ReLU -> 1x1 conv (MXU, bf16 operands, f32 acc) -> +b2 -> ReLU
        a = jnp.maximum(x * s1_ref[...] + b1_ref[...], 0.0)
        h = jnp.dot(a.astype(jnp.bfloat16), w1_ref[...],
                    preferred_element_type=jnp.float32)           # (HW, Cmid)
        h = jnp.maximum(h + b2_ref[...], 0.0).astype(jnp.bfloat16)

        # ---- All 9 taps of the 3x3 conv in ONE matmul (N = 9*Cout) ----
        m = jnp.dot(h, w2_ref[...], preferred_element_type=jnp.float32)   # (HW, 9*Cout)

        # Flat row-padded buffer: zero head/tail rows (covers out-of-image dy
        # taps), image rows at [OFF, OFF+HW).  Head/tail are re-zeroed every
        # step so no cross-step scratch state is assumed (megacore safe).
        m_ref[pl.ds(0, OFF), :] = jnp.zeros((OFF, ninec), jnp.float32)
        m_ref[pl.ds(OFF + HW, TAIL), :] = jnp.zeros((TAIL, ninec), jnp.float32)
        m_ref[pl.ds(OFF, HW), :] = m

        # Shifted-window tap reduction (VPU).  For output r = y*W + x, tap
        # (dy,dx) lives at scratch row OFF + r + (dy-1)*W + (dx-1) in columns
        # [t*Cout, (t+1)*Cout).  dx=0 / dx=2 taps wrap across image rows at
        # x=0 / x=W-1; the masks zero exactly those contributions.
        sums = [None, None, None]                                 # per dx group
        for dy in range(3):
            for dx in range(3):
                t = dy * 3 + dx
                start = OFF + (dy - 1) * W + (dx - 1)             # static Python int
                c = m_ref[pl.ds(start, HW), pl.ds(t * cout, cout)]
                sums[dx] = c if sums[dx] is None else sums[dx] + c
        conv = sums[1] + lmask_ref[...] * sums[0] + rmask_ref[...] * sums[2]

        o_ref[0, :, cin:ctot] = conv

    return kernel


# ----------------------------------------------------------------------------
# Wrapper: BN folding, weight packing, layout glue, pallas_call
# ----------------------------------------------------------------------------
@jax.jit
def dense_layer_forward(x_nchw, params):
    N, cin, H, W = x_nchw.shape
    cmid = params["w1"].shape[1]
    cout = params["w2"].shape[-1]
    HW = H * W
    ctot = cin + cout
    ninec = 9 * cout

    # Fold eval-mode BatchNorm into scale/bias; fold BN2's scale into w1.
    s1 = params["bn1_gamma"] * jax.lax.rsqrt(params["bn1_var"] + _BN_EPS)
    b1 = params["bn1_beta"] - params["bn1_mean"] * s1
    s2 = params["bn2_gamma"] * jax.lax.rsqrt(params["bn2_var"] + _BN_EPS)
    b2 = params["bn2_beta"] - params["bn2_mean"] * s2
    w1_bf = (params["w1"] * s2[None, :]).astype(jnp.bfloat16)            # (Cin, Cmid)
    # (3,3,Cmid,Cout) HWIO -> (Cmid, 9*Cout); tap t = dy*3+dx -> cols [t*Cout,(t+1)*Cout)
    w2_bf = jnp.transpose(params["w2"], (2, 0, 1, 3)).reshape(cmid, ninec) \
               .astype(jnp.bfloat16)

    # NCHW -> flattened NHWC rows.
    # TODO(synk): keeping the surrounding model NHWC end-to-end would drop both
    #             of these transposes entirely.
    x_rows = jnp.transpose(x_nchw, (0, 2, 3, 1)).reshape(N, HW, cin)

    # Column-boundary masks for the dx=0 / dx=2 tap groups.
    col = jnp.tile(jnp.arange(W, dtype=jnp.int32), H)
    lmask = (col != 0).astype(jnp.float32).reshape(HW, 1)
    rmask = (col != W - 1).astype(jnp.float32).reshape(HW, 1)

    # Flat-buffer geometry: OFF/TAIL >= W+1 zero rows above/below the image so
    # out-of-image dy shifted windows only ever read zeros; 8-row aligned.
    OFF = ((W + 1 + 7) // 8) * 8
    TAIL = OFF
    R = OFF + HW + TAIL

    # VMEM budget: single-counted footprint (double-buffered blocks counted as
    # x2 exactly once), +25% headroom, capped at 75% of this chip's VMEM.
    est = (2 * HW * cin * 4                      # x input blocks (double buffered)
           + 2 * HW * ctot * 4                   # output blocks
           + 2 * (cin * cmid + cmid * ninec) * 2 # bf16 weights
           + 2 * (2 * cin + cmid + 2 * HW) * 4   # scales / biases / masks
           + R * ninec * 4                       # m scratch
           + HW * (cin + 2 * cmid + ninec + ctot) * 4)  # live intermediates
    try:
        phys = int(pltpu.get_tpu_info().vmem_capacity_bytes)
    except Exception:
        phys = 64 * 1024 * 1024                  # conservative (v7x per-TC)
    vmem_limit = int(min(max(est * 5 // 4, 32 * 1024 * 1024), phys * 3 // 4))

    kernel = _build_kernel(H, W, cin, cmid, cout, OFF, TAIL)

    # TODO(synk): at production shapes, batch several images per grid step
    #             (x BlockSpec (B, HW, Cin)) to amortize per-step overhead,
    #             with B chosen from the per-generation VMEM budget.
    out_rows = pl.pallas_call(
        kernel,
        out_shape=jax.ShapeDtypeStruct((N, HW, ctot), jnp.float32),
        grid_spec=pltpu.PrefetchScalarGridSpec(
            num_scalar_prefetch=0,
            grid=(N,),
            in_specs=[
                pl.BlockSpec((1, HW, cin), lambda n: (n, 0, 0)),
                pl.BlockSpec((1, cin), lambda n: (0, 0)),
                pl.BlockSpec((1, cin), lambda n: (0, 0)),
                pl.BlockSpec((cin, cmid), lambda n: (0, 0)),
                pl.BlockSpec((1, cmid), lambda n: (0, 0)),
                pl.BlockSpec((cmid, ninec), lambda n: (0, 0)),
                pl.BlockSpec((HW, 1), lambda n: (0, 0)),
                pl.BlockSpec((HW, 1), lambda n: (0, 0)),
            ],
            out_specs=pl.BlockSpec((1, HW, ctot), lambda n: (n, 0, 0)),
            scratch_shapes=[pltpu.VMEM((R, ninec), jnp.float32)],
        ),
        compiler_params=pltpu.CompilerParams(
            dimension_semantics=("parallel",),
            vmem_limit_bytes=vmem_limit,
        ),
    )(x_rows, s1.reshape(1, -1), b1.reshape(1, -1), w1_bf,
      b2.reshape(1, -1), w2_bf, lmask, rmask)

    # (N, HW, Cin+Cout) -> NCHW.  drop_rate == 0.0 -> dropout is a no-op.
    # TODO(synk): if drop_rate > 0 were needed, use pltpu.prng_seed +
    #             pltpu.stateful_bernoulli on the conv slice inside the kernel.
    return jnp.transpose(out_rows.reshape(N, H, W, ctot), (0, 3, 1, 2))


# ----------------------------------------------------------------------------
# Pure-JAX reference (for correctness check)
# ----------------------------------------------------------------------------
def dense_layer_reference(x, params):
    s1 = params["bn1_gamma"] / jnp.sqrt(params["bn1_var"] + _BN_EPS)
    b1 = params["bn1_beta"] - params["bn1_mean"] * s1
    s2 = params["bn2_gamma"] / jnp.sqrt(params["bn2_var"] + _BN_EPS)
    b2 = params["bn2_beta"] - params["bn2_mean"] * s2

    h = jnp.maximum(x * s1[None, :, None, None] + b1[None, :, None, None], 0.0)
    w1_oihw = jnp.transpose(params["w1"])[:, :, None, None]        # (Cmid, Cin, 1, 1)
    h = jax.lax.conv_general_dilated(
        h, w1_oihw, (1, 1), "VALID", dimension_numbers=("NCHW", "OIHW", "NCHW"))
    h = jnp.maximum(h * s2[None, :, None, None] + b2[None, :, None, None], 0.0)
    w2_oihw = jnp.transpose(params["w2"], (3, 2, 0, 1))            # (Cout, Cmid, 3, 3)
    out = jax.lax.conv_general_dilated(
        h, w2_oihw, (1, 1), "SAME", dimension_numbers=("NCHW", "OIHW", "NCHW"))
    return jnp.concatenate([x, out], axis=1)


# ----------------------------------------------------------------------------
# Deterministic parameter init + demo run
# ----------------------------------------------------------------------------
def init_params(key, in_channels, growth_rate, bn_size):
    cmid = bn_size * growth_rate
    ks = jax.random.split(key, 10)
    return {
        "bn1_gamma": jax.random.uniform(ks[0], (in_channels,), minval=0.5, maxval=1.5),
        "bn1_beta":  jax.random.normal(ks[1], (in_channels,)) * 0.1,
        "bn1_mean":  jax.random.normal(ks[2], (in_channels,)) * 0.1,
        "bn1_var":   jax.random.uniform(ks[3], (in_channels,), minval=0.5, maxval=1.5),
        "w1":        jax.random.normal(ks[4], (in_channels, cmid)) * 0.1,        # (Cin, Cmid)
        "bn2_gamma": jax.random.uniform(ks[5], (cmid,), minval=0.5, maxval=1.5),
        "bn2_beta":  jax.random.normal(ks[6], (cmid,)) * 0.1,
        "bn2_mean":  jax.random.normal(ks[7], (cmid,)) * 0.1,
        "bn2_var":   jax.random.uniform(ks[8], (cmid,), minval=0.5, maxval=1.5),
        "w2":        jax.random.normal(ks[9], (3, 3, cmid, growth_rate)) * 0.1,  # HWIO
    }


if __name__ == "__main__":
    in_channels, growth_rate, bn_size = 4, 8, 4
    N, H, W = 2, 16, 16

    root = jax.random.PRNGKey(0)
    k_x, k_p = jax.random.split(root)
    x = jax.random.normal(k_x, (N, in_channels, H, W), dtype=jnp.float32)
    params = init_params(k_p, in_channels, growth_rate, bn_size)

    out = jax.block_until_ready(dense_layer_forward(x, params))
    ref = jax.block_until_ready(dense_layer_reference(x, params))

    assert out.shape == (N, in_channels + growth_rate, H, W), out.shape
    assert out.dtype == jnp.float32
    assert bool(jnp.allclose(out, ref, rtol=2e-2, atol=2e-2)), "mismatch vs reference"

    print("KERNEL_OK")
</pallas_src>

<mosaic_0001>
module attributes {stable_mosaic.version = 11 : i64} {
  func.func @kernel(%arg0: i32, %arg1: memref<1x256x4xf32, #tpu.memory_space<vmem>>, %arg2: memref<1x4xf32, #tpu.memory_space<vmem>>, %arg3: memref<1x4xf32, #tpu.memory_space<vmem>>, %arg4: memref<4x32xbf16, #tpu.memory_space<vmem>>, %arg5: memref<1x32xf32, #tpu.memory_space<vmem>>, %arg6: memref<32x72xbf16, #tpu.memory_space<vmem>>, %arg7: memref<256x1xf32, #tpu.memory_space<vmem>>, %arg8: memref<256x1xf32, #tpu.memory_space<vmem>>, %arg9: memref<1x256x12xf32, #tpu.memory_space<vmem>>, %arg10: memref<304x72xf32, #tpu.memory_space<vmem>>) attributes {dimension_semantics = [#tpu.dimension_semantics<parallel>], iteration_bounds = array<i64: 2>, scalar_prefetch = 0 : i64, scratch_operands = 1 : i64, tpu.core_type = #tpu.core_type<tc>, window_params = [{transform_indices = @transform_0, window_bounds = array<i64: 1, 256, 4>}, {pipeline_mode = #tpu.pipeline_mode<synchronous>, transform_indices = @transform_1, window_bounds = array<i64: 1, 4>}, {pipeline_mode = #tpu.pipeline_mode<synchronous>, transform_indices = @transform_2, window_bounds = array<i64: 1, 4>}, {pipeline_mode = #tpu.pipeline_mode<synchronous>, transform_indices = @transform_3, window_bounds = array<i64: 4, 32>}, {pipeline_mode = #tpu.pipeline_mode<synchronous>, transform_indices = @transform_4, window_bounds = array<i64: 1, 32>}, {pipeline_mode = #tpu.pipeline_mode<synchronous>, transform_indices = @transform_5, window_bounds = array<i64: 32, 72>}, {pipeline_mode = #tpu.pipeline_mode<synchronous>, transform_indices = @transform_6, window_bounds = array<i64: 256, 1>}, {pipeline_mode = #tpu.pipeline_mode<synchronous>, transform_indices = @transform_7, window_bounds = array<i64: 256, 1>}, {transform_indices = @transform_8, window_bounds = array<i64: 1, 256, 12>}]} {
    %c0 = arith.constant 0 : index
    %c0_0 = arith.constant 0 : index
    %c0_1 = arith.constant 0 : index
    %0 = vector.load %arg1[%c0, %c0_0, %c0_1] : memref<1x256x4xf32, #tpu.memory_space<vmem>>, vector<1x256x4xf32>
    %1 = vector.shape_cast %0 : vector<1x256x4xf32> to vector<256x4xf32>
    %c0_2 = arith.constant 0 : index
    %c0_3 = arith.constant 0 : index
    %c0_4 = arith.constant 0 : index
    %2 = vector.load %arg9[%c0_2, %c0_3, %c0_4] : memref<1x256x12xf32, #tpu.memory_space<vmem>>, vector<1x256x4xf32>
    %3 = vector.shape_cast %2 : vector<1x256x4xf32> to vector<256x4xf32>
    %4 = vector.shape_cast %1 : vector<256x4xf32> to vector<1x256x4xf32>
    tpu.vector_store %arg9[%c0_2, %c0_3, %c0_4], %4 {strides = array<i32>} : memref<1x256x12xf32, #tpu.memory_space<vmem>>, vector<1x256x4xf32>,
    %c0_5 = arith.constant 0 : index
    %c0_6 = arith.constant 0 : index
    %5 = vector.load %arg2[%c0_5, %c0_6] : memref<1x4xf32, #tpu.memory_space<vmem>>, vector<1x4xf32>
    %6 = vector.broadcast %5 : vector<1x4xf32> to vector<256x4xf32>
    %7 = arith.mulf %1, %6 : vector<256x4xf32>
    %c0_7 = arith.constant 0 : index
    %c0_8 = arith.constant 0 : index
    %8 = vector.load %arg3[%c0_7, %c0_8] : memref<1x4xf32, #tpu.memory_space<vmem>>, vector<1x4xf32>
    %9 = vector.broadcast %8 : vector<1x4xf32> to vector<256x4xf32>
    %10 = arith.addf %7, %9 : vector<256x4xf32>
    %cst = arith.constant 0.000000e+00 : f32
    %11 = vector.broadcast %cst : f32 to vector<256x4xf32>
    %12 = arith.maximumf %10, %11 : vector<256x4xf32>
    %13 = arith.truncf %12 : vector<256x4xf32> to vector<256x4xbf16>
    %c0_9 = arith.constant 0 : index
    %c0_10 = arith.constant 0 : index
    %14 = vector.load %arg4[%c0_9, %c0_10] : memref<4x32xbf16, #tpu.memory_space<vmem>>, vector<4x32xbf16>
    %cst_11 = arith.constant dense<0.000000e+00> : vector<256x32xf32>
    %15 = tpu.matmul %13, %14, %cst_11 {dimension_numbers = #tpu.dot_dimension_numbers<[1], [0], [0], [1], [0, 0, 1, 1], [], []>} : vector<256x4xbf16>, vector<4x32xbf16>, vector<256x32xf32> -> vector<256x32xf32>
    %c0_12 = arith.constant 0 : index
    %c0_13 = arith.constant 0 : index
    %16 = vector.load %arg5[%c0_12, %c0_13] : memref<1x32xf32, #tpu.memory_space<vmem>>, vector<1x32xf32>
    %17 = vector.broadcast %16 : vector<1x32xf32> to vector<256x32xf32>
    %18 = arith.addf %15, %17 : vector<256x32xf32>
    %cst_14 = arith.constant 0.000000e+00 : f32
    %19 = vector.broadcast %cst_14 : f32 to vector<256x32xf32>
    %20 = arith.maximumf %18, %19 : vector<256x32xf32>
    %21 = arith.truncf %20 : vector<256x32xf32> to vector<256x32xbf16>
    %c0_15 = arith.constant 0 : index
    %c0_16 = arith.constant 0 : index
    %22 = vector.load %arg6[%c0_15, %c0_16] : memref<32x72xbf16, #tpu.memory_space<vmem>>, vector<32x72xbf16>
    %cst_17 = arith.constant dense<0.000000e+00> : vector<256x72xf32>
    %23 = tpu.matmul %21, %22, %cst_17 {dimension_numbers = #tpu.dot_dimension_numbers<[1], [0], [0], [1], [0, 0, 1, 1], [], []>} : vector<256x32xbf16>, vector<32x72xbf16>, vector<256x72xf32> -> vector<256x72xf32>
    %cst_18 = arith.constant 0.000000e+00 : f32
    %24 = vector.broadcast %cst_18 : f32 to vector<24x72xf32>
    %c0_19 = arith.constant 0 : index
    %c0_20 = arith.constant 0 : index
    %25 = vector.load %arg10[%c0_19, %c0_20] : memref<304x72xf32, #tpu.memory_space<vmem>>, vector<24x72xf32>
    tpu.vector_store %arg10[%c0_19, %c0_20], %24 {strides = array<i32>} : memref<304x72xf32, #tpu.memory_space<vmem>>, vector<24x72xf32>,
    %cst_21 = arith.constant 0.000000e+00 : f32
    %26 = vector.broadcast %cst_21 : f32 to vector<24x72xf32>
    %c280 = arith.constant 280 : index
    %c0_22 = arith.constant 0 : index
    %27 = vector.load %arg10[%c280, %c0_22] : memref<304x72xf32, #tpu.memory_space<vmem>>, vector<24x72xf32>
    tpu.vector_store %arg10[%c280, %c0_22], %26 {strides = array<i32>} : memref<304x72xf32, #tpu.memory_space<vmem>>, vector<24x72xf32>,
    %c24 = arith.constant 24 : index
    %c0_23 = arith.constant 0 : index
    %28 = vector.load %arg10[%c24, %c0_23] : memref<304x72xf32, #tpu.memory_space<vmem>>, vector<256x72xf32>
    tpu.vector_store %arg10[%c24, %c0_23], %23 {strides = array<i32>} : memref<304x72xf32, #tpu.memory_space<vmem>>, vector<256x72xf32>,
    %c7 = arith.constant 7 : index
    %c0_24 = arith.constant 0 : index
    %29 = vector.load %arg10[%c7, %c0_24] : memref<304x72xf32, #tpu.memory_space<vmem>>, vector<256x8xf32>
    %c8 = arith.constant 8 : index
    %c8_25 = arith.constant 8 : index
    %30 = vector.load %arg10[%c8, %c8_25] : memref<304x72xf32, #tpu.memory_space<vmem>>, vector<256x8xf32>
    %c9 = arith.constant 9 : index
    %c16 = arith.constant 16 : index
    %31 = vector.load %arg10[%c9, %c16] : memref<304x72xf32, #tpu.memory_space<vmem>>, vector<256x8xf32>
    %c23 = arith.constant 23 : index
    %c24_26 = arith.constant 24 : index
    %32 = vector.load %arg10[%c23, %c24_26] : memref<304x72xf32, #tpu.memory_space<vmem>>, vector<256x8xf32>
    %33 = arith.addf %29, %32 : vector<256x8xf32>
    %c24_27 = arith.constant 24 : index
    %c32 = arith.constant 32 : index
    %34 = vector.load %arg10[%c24_27, %c32] : memref<304x72xf32, #tpu.memory_space<vmem>>, vector<256x8xf32>
    %35 = arith.addf %30, %34 : vector<256x8xf32>
    %c25 = arith.constant 25 : index
    %c40 = arith.constant 40 : index
    %36 = vector.load %arg10[%c25, %c40] : memref<304x72xf32, #tpu.memory_space<vmem>>, vector<256x8xf32>
    %37 = arith.addf %31, %36 : vector<256x8xf32>
    %c39 = arith.constant 39 : index
    %c48 = arith.constant 48 : index
    %38 = vector.load %arg10[%c39, %c48] : memref<304x72xf32, #tpu.memory_space<vmem>>, vector<256x8xf32>
    %39 = arith.addf %33, %38 : vector<256x8xf32>
    %c40_28 = arith.constant 40 : index
    %c56 = arith.constant 56 : index
    %40 = vector.load %arg10[%c40_28, %c56] : memref<304x72xf32, #tpu.memory_space<vmem>>, vector<256x8xf32>
    %41 = arith.addf %35, %40 : vector<256x8xf32>
    %c41 = arith.constant 41 : index
    %c64 = arith.constant 64 : index
    %42 = vector.load %arg10[%c41, %c64] : memref<304x72xf32, #tpu.memory_space<vmem>>, vector<256x8xf32>
    %43 = arith.addf %37, %42 : vector<256x8xf32>
    %c0_29 = arith.constant 0 : index
    %c0_30 = arith.constant 0 : index
    %44 = vector.load %arg7[%c0_29, %c0_30] : memref<256x1xf32, #tpu.memory_space<vmem>>, vector<256x1xf32>
    %45 = vector.broadcast %44 : vector<256x1xf32> to vector<256x8xf32>
    %46 = arith.mulf %45, %39 : vector<256x8xf32>
    %47 = arith.addf %41, %46 : vector<256x8xf32>
    %c0_31 = arith.constant 0 : index
    %c0_32 = arith.constant 0 : index
    %48 = vector.load %arg8[%c0_31, %c0_32] : memref<256x1xf32, #tpu.memory_space<vmem>>, vector<256x1xf32>
    %49 = vector.broadcast %48 : vector<256x1xf32> to vector<256x8xf32>
    %50 = arith.mulf %49, %43 : vector<256x8xf32>
    %51 = arith.addf %47, %50 : vector<256x8xf32>
    %c0_33 = arith.constant 0 : index
    %c0_34 = arith.constant 0 : index
    %c4 = arith.constant 4 : index
    %52 = vector.load %arg9[%c0_33, %c0_34, %c4] : memref<1x256x12xf32, #tpu.memory_space<vmem>>, vector<1x256x8xf32>
    %53 = vector.shape_cast %52 : vector<1x256x8xf32> to vector<256x8xf32>
    %54 = vector.shape_cast %51 : vector<256x8xf32> to vector<1x256x8xf32>
    tpu.vector_store %arg9[%c0_33, %c0_34, %c4], %54 {strides = array<i32>} : memref<1x256x12xf32, #tpu.memory_space<vmem>>, vector<1x256x8xf32>,
    return
  }
  func.func @transform_0(%arg0: i32) -> (i32, i32, i32) {
    %c0_i32 = arith.constant 0 : i32
    %c0_i32_0 = arith.constant 0 : i32
    %c0_i32_1 = arith.constant 0 : i32
    return %arg0, %c0_i32, %c0_i32_0 : i32, i32, i32
  }
  func.func @transform_1(%arg0: i32) -> (i32, i32) {
    %c0_i32 = arith.constant 0 : i32
    %c0_i32_0 = arith.constant 0 : i32
    %c0_i32_1 = arith.constant 0 : i32
    return %c0_i32, %c0_i32_0 : i32, i32
  }
  func.func @transform_2(%arg0: i32) -> (i32, i32) {
    %c0_i32 = arith.constant 0 : i32
    %c0_i32_0 = arith.constant 0 : i32
    %c0_i32_1 = arith.constant 0 : i32
    return %c0_i32, %c0_i32_0 : i32, i32
  }
  func.func @transform_3(%arg0: i32) -> (i32, i32) {
    %c0_i32 = arith.constant 0 : i32
    %c0_i32_0 = arith.constant 0 : i32
    %c0_i32_1 = arith.constant 0 : i32
    return %c0_i32, %c0_i32_0 : i32, i32
  }
  func.func @transform_4(%arg0: i32) -> (i32, i32) {
    %c0_i32 = arith.constant 0 : i32
    %c0_i32_0 = arith.constant 0 : i32
    %c0_i32_1 = arith.constant 0 : i32
    return %c0_i32, %c0_i32_0 : i32, i32
  }
  func.func @transform_5(%arg0: i32) -> (i32, i32) {
    %c0_i32 = arith.constant 0 : i32
    %c0_i32_0 = arith.constant 0 : i32
    %c0_i32_1 = arith.constant 0 : i32
    return %c0_i32, %c0_i32_0 : i32, i32
  }
  func.func @transform_6(%arg0: i32) -> (i32, i32) {
    %c0_i32 = arith.constant 0 : i32
    %c0_i32_0 = arith.constant 0 : i32
    %c0_i32_1 = arith.constant 0 : i32
    return %c0_i32, %c0_i32_0 : i32, i32
  }
  func.func @transform_7(%arg0: i32) -> (i32, i32) {
    %c0_i32 = arith.constant 0 : i32
    %c0_i32_0 = arith.constant 0 : i32
    %c0_i32_1 = arith.constant 0 : i32
    return %c0_i32, %c0_i32_0 : i32, i32
  }
  func.func @transform_8(%arg0: i32) -> (i32, i32, i32) {
    %c0_i32 = arith.constant 0 : i32
    %c0_i32_0 = arith.constant 0 : i32
    %c0_i32_1 = arith.constant 0 : i32
    return %arg0, %c0_i32, %c0_i32_0 : i32, i32, i32
  }
}

</mosaic_0001>

<llo_original>
// kernel: dense_layer_forward.1
$region0: #{dense_layer_forward.1}
  #allocation0 [shape = 'u32[]', space=smem, size = 0x4, offset = 0x4, fixed_abs, tag = 'smem constant byte address 0x4 - core index']
  #allocation1 [shape = 'u32[72,128]{1,0:T(1,128)}', space=vmem, size = 0x9000, scoped, tag = 'internal scratch']
  #allocation2 [shape = 'f32[304,72]{1,0:T(8,128)}', space=vmem, size = 0x26000, scoped, tag = 'scratch operand']
  %s0 = inlined_call_operand.vmem [shape: f32[2,256,4], index: 0, kind: input, shape index: {}]
  %s1 = inlined_call_operand.vmem [shape: f32[1,4], index: 1, kind: input, shape index: {}]
  %s2 = inlined_call_operand.vmem [shape: f32[1,4], index: 2, kind: input, shape index: {}]
  %s3 = inlined_call_operand.vmem [shape: bf16[4,32], index: 3, kind: input, shape index: {}]
  %s4 = inlined_call_operand.vmem [shape: f32[1,32], index: 4, kind: input, shape index: {}]
  %s5 = inlined_call_operand.vmem [shape: bf16[32,72], index: 5, kind: input, shape index: {}]
  %s6 = inlined_call_operand.vmem [shape: f32[256,1], index: 6, kind: input, shape index: {}]
  %s7 = inlined_call_operand.vmem [shape: f32[256,1], index: 7, kind: input, shape index: {}]
  %s8 = inlined_call_operand.vmem [shape: f32[2,256,12], index: 8, kind: output, shape index: {}]
  %s9 = sld [smem:[#allocation0]]
  $region65: #{dense_layer_forward.1} parent=0
    _
  %s11 = ssub.s32 1, %s9
  %s12 = scalar_select 0, %s11, %s9
  loop: start=0, step=1, limit=4
  $region2: #{dense_layer_forward.1} parent=0 // loop_pre_header
    _
  $region3: #{dense_layer_forward.1} parent=0 // loop_header
    %s14 = sphi 0, %s18
    %p15 = scmp.ge.s32.totalorder %s14, 4
    %s24 = sphi 0, %s26
    %s27 = sphi 0, %s24
    %s28 = sphi 0, %s27
    %s44 = sphi 0, %s28
    %s48 = sphi 0, %s48
    %s50 = sphi 0, %s48
    %s51 = sphi 0, %s50
    %s65 = sphi 0, %s51
    %s69 = sphi 0, %s69
    %s71 = sphi 0, %s69
    %s72 = sphi 0, %s71
    %s86 = sphi 0, %s72
    %s90 = sphi 0, %s90
    %s92 = sphi 0, %s90
    %s93 = sphi 0, %s92
    %s107 = sphi 0, %s93
    %s111 = sphi 0, %s111
    %s113 = sphi 0, %s111
    %s114 = sphi 0, %s113
    %s128 = sphi 0, %s114
    %s132 = sphi 0, %s132
    %s134 = sphi 0, %s132
    %s135 = sphi 0, %s134
    %s149 = sphi 0, %s135
    %s153 = sphi 0, %s153
    %s155 = sphi 0, %s153
    %s156 = sphi 0, %s155
    %s170 = sphi 0, %s156
    %s174 = sphi 0, %s174
    %s176 = sphi 0, %s174
    %s177 = sphi 0, %s176
    %s191 = sphi 0, %s177
    %s197 = sphi 0, %s199
    %s200 = sphi 0, %s197
    %s201 = sphi 0, %s200
    %s217 = sphi 0, %s201
  $region4: #{dense_layer_forward.1} parent=0 // loop_header_branch
    %17 = sbr.rel (%p15) target = $region8
  $region5: #{dense_layer_forward.1} parent=0 // loop_body
    %s19 = ssub.s32 %s14, 1
    %s20 = ssub.s32 %s14, 2
    %s21 = sadd.s32 %s14, 1
    %s22 = ssub.s32 %s14, %s21
    %p23 = scmp.eq.s32.totalorder %s22, 0
    %s25 = sadd.s32 %s24, 1
    %s26 = scalar_select %p23, %s24, %s25
    %p29 = pneg %p23
    %p30 = scmp.eq.s32.totalorder %s14, 1
    %p31 = por %p29, %p30
    %p32 = scmp.ne.s32.totalorder %s24, %s27
    %p33 = scmp.eq.s32.totalorder %s14, 0
    %p34 = por %p32, %p33
    %p35 = scmp.ne.s32.totalorder %s24, %s27
    %p36 = scmp.eq.s32.totalorder %s19, 1
    %p37 = por %p35, %p36
    %p38 = scmp.ne.s32.totalorder %s27, %s28
    %p39 = scmp.eq.s32.totalorder %s19, 0
    %p40 = por %p38, %p39
    %p41 = scmp.ne.s32.totalorder %s27, %s28
    %p42 = scmp.eq.s32.totalorder %s20, 1
    %p43 = por %p41, %p42
    %p45 = scmp.ne.s32.totalorder %s28, %s44
    %p46 = scmp.eq.s32.totalorder %s20, 0
    %p47 = por %p45, %p46
    %s49 = sadd.s32 %s48, 1
    %p52 = scmp.eq.s32.totalorder %s14, 1
    %p53 = scmp.ne.s32.totalorder %s48, %s50
    %p54 = scmp.eq.s32.totalorder %s14, 0
    %p55 = por %p53, %p54
    %p56 = scmp.ne.s32.totalorder %s48, %s50
    %p57 = scmp.eq.s32.totalorder %s19, 1
    %p58 = por %p56, %p57
    %p59 = scmp.ne.s32.totalorder %s50, %s51
    %p60 = scmp.eq.s32.totalorder %s19, 0
    %p61 = por %p59, %p60
    %p62 = scmp.ne.s32.totalorder %s50, %s51
    %p63 = scmp.eq.s32.totalorder %s20, 1
    %p64 = por %p62, %p63
    %p66 = scmp.ne.s32.totalorder %s51, %s65
    %p67 = scmp.eq.s32.totalorder %s20, 0
    %p68 = por %p66, %p67
    %s70 = sadd.s32 %s69, 1
    %p73 = scmp.eq.s32.totalorder %s14, 1
    %p74 = scmp.ne.s32.totalorder %s69, %s71
    %p75 = scmp.eq.s32.totalorder %s14, 0
    %p76 = por %p74, %p75
    %p77 = scmp.ne.s32.totalorder %s69, %s71
    %p78 = scmp.eq.s32.totalorder %s19, 1
    %p79 = por %p77, %p78
    %p80 = scmp.ne.s32.totalorder %s71, %s72
    %p81 = scmp.eq.s32.totalorder %s19, 0
    %p82 = por %p80, %p81
    %p83 = scmp.ne.s32.totalorder %s71, %s72
    %p84 = scmp.eq.s32.totalorder %s20, 1
    %p85 = por %p83, %p84
    %p87 = scmp.ne.s32.totalorder %s72, %s86
    %p88 = scmp.eq.s32.totalorder %s20, 0
    %p89 = por %p87, %p88
    %s91 = sadd.s32 %s90, 1
    %p94 = scmp.eq.s32.totalorder %s14, 1
    %p95 = scmp.ne.s32.totalorder %s90, %s92
    %p96 = scmp.eq.s32.totalorder %s14, 0
    %p97 = por %p95, %p96
    %p98 = scmp.ne.s32.totalorder %s90, %s92
    %p99 = scmp.eq.s32.totalorder %s19, 1
    %p100 = por %p98, %p99
    %p101 = scmp.ne.s32.totalorder %s92, %s93
    %p102 = scmp.eq.s32.totalorder %s19, 0
    %p103 = por %p101, %p102
    %p104 = scmp.ne.s32.totalorder %s92, %s93
    %p105 = scmp.eq.s32.totalorder %s20, 1
    %p106 = por %p104, %p105
    %p108 = scmp.ne.s32.totalorder %s93, %s107
    %p109 = scmp.eq.s32.totalorder %s20, 0
    %p110 = por %p108, %p109
    %s112 = sadd.s32 %s111, 1
    %p115 = scmp.eq.s32.totalorder %s14, 1
    %p116 = scmp.ne.s32.totalorder %s111, %s113
    %p117 = scmp.eq.s32.totalorder %s14, 0
    %p118 = por %p116, %p117
    %p119 = scmp.ne.s32.totalorder %s111, %s113
    %p120 = scmp.eq.s32.totalorder %s19, 1
    %p121 = por %p119, %p120
    %p122 = scmp.ne.s32.totalorder %s113, %s114
    %p123 = scmp.eq.s32.totalorder %s19, 0
    %p124 = por %p122, %p123
    %p125 = scmp.ne.s32.totalorder %s113, %s114
    %p126 = scmp.eq.s32.totalorder %s20, 1
    %p127 = por %p125, %p126
    %p129 = scmp.ne.s32.totalorder %s114, %s128
    %p130 = scmp.eq.s32.totalorder %s20, 0
    %p131 = por %p129, %p130
    %s133 = sadd.s32 %s132, 1
    %p136 = scmp.eq.s32.totalorder %s14, 1
    %p137 = scmp.ne.s32.totalorder %s132, %s134
    %p138 = scmp.eq.s32.totalorder %s14, 0
    %p139 = por %p137, %p138
    %p140 = scmp.ne.s32.totalorder %s132, %s134
    %p141 = scmp.eq.s32.totalorder %s19, 1
    %p142 = por %p140, %p141
    %p143 = scmp.ne.s32.totalorder %s134, %s135
    %p144 = scmp.eq.s32.totalorder %s19, 0
    %p145 = por %p143, %p144
    %p146 = scmp.ne.s32.totalorder %s134, %s135
    %p147 = scmp.eq.s32.totalorder %s20, 1
    %p148 = por %p146, %p147
    %p150 = scmp.ne.s32.totalorder %s135, %s149
    %p151 = scmp.eq.s32.totalorder %s20, 0
    %p152 = por %p150, %p151
    %s154 = sadd.s32 %s153, 1
    %p157 = scmp.eq.s32.totalorder %s14, 1
    %p158 = scmp.ne.s32.totalorder %s153, %s155
    %p159 = scmp.eq.s32.totalorder %s14, 0
    %p160 = por %p158, %p159
    %p161 = scmp.ne.s32.totalorder %s153, %s155
    %p162 = scmp.eq.s32.totalorder %s19, 1
    %p163 = por %p161, %p162
    %p164 = scmp.ne.s32.totalorder %s155, %s156
    %p165 = scmp.eq.s32.totalorder %s19, 0
    %p166 = por %p164, %p165
    %p167 = scmp.ne.s32.totalorder %s155, %s156
    %p168 = scmp.eq.s32.totalorder %s20, 1
    %p169 = por %p167, %p168
    %p171 = scmp.ne.s32.totalorder %s156, %s170
    %p172 = scmp.eq.s32.totalorder %s20, 0
    %p173 = por %p171, %p172
    %s175 = sadd.s32 %s174, 1
    %p178 = scmp.eq.s32.totalorder %s14, 1
    %p179 = scmp.ne.s32.totalorder %s174, %s176
    %p180 = scmp.eq.s32.totalorder %s14, 0
    %p181 = por %p179, %p180
    %p182 = scmp.ne.s32.totalorder %s174, %s176
    %p183 = scmp.eq.s32.totalorder %s19, 1
    %p184 = por %p182, %p183
    %p185 = scmp.ne.s32.totalorder %s176, %s177
    %p186 = scmp.eq.s32.totalorder %s19, 0
    %p187 = por %p185, %p186
    %p188 = scmp.ne.s32.totalorder %s176, %s177
    %p189 = scmp.eq.s32.totalorder %s20, 1
    %p190 = por %p188, %p189
    %p192 = scmp.ne.s32.totalorder %s177, %s191
    %p193 = scmp.eq.s32.totalorder %s20, 0
    %p194 = por %p192, %p193
    %s195 = ssub.s32 %s14, %s21
    %p196 = scmp.eq.s32.totalorder %s195, 0
    %s198 = sadd.s32 %s197, 1
    %s199 = scalar_select %p196, %s197, %s198
    %p202 = pneg %p196
    %p203 = scmp.eq.s32.totalorder %s14, 1
    %p204 = por %p202, %p203
    %p205 = scmp.ne.s32.totalorder %s197, %s200
    %p206 = scmp.eq.s32.totalorder %s14, 0
    %p207 = por %p205, %p206
    %p208 = scmp.ne.s32.totalorder %s197, %s200
    %p209 = scmp.eq.s32.totalorder %s19, 1
    %p210 = por %p208, %p209
    %p211 = scmp.ne.s32.totalorder %s200, %s201
    %p212 = scmp.eq.s32.totalorder %s19, 0
    %p213 = por %p211, %p212
    %p214 = scmp.ne.s32.totalorder %s200, %s201
    %p215 = scmp.eq.s32.totalorder %s20, 1
    %p216 = por %p214, %p215
    %p218 = scmp.ne.s32.totalorder %s201, %s217
    %p219 = scmp.eq.s32.totalorder %s20, 0
    %p220 = por %p218, %p219
    %p221 = scmp.le.s32.totalorder 1, %s14
    %p222 = scmp.lt.s32.totalorder %s14, 3
    %p223 = pnand %p221, %p222
    %p224 = pneg %p223
    // Predicated region
    $region9: #{dense_layer_forward.1} parent=5 // pred_check
      _
    $region10: #{dense_layer_forward.1} parent=5 // pred_check_branch
      %226 = sbr.rel (%p223) target = $region12
    $region11: #{dense_layer_forward.1} parent=5 // pred_region
      %s227 = ssub.s32 %s14, 1
      // Predicated region
      $region13: #{dense_layer_forward.1} parent=11 // pred_check
        %p228 = pneg %p61
      $region14: #{dense_layer_forward.1} parent=11 // pred_check_branch
        %230 = sbr.rel (%p228) target = $region16
      $region15: #{dense_layer_forward.1} parent=11 // pred_region
        _
      $region16: #{dense_layer_forward.1} parent=11 // pred_fallthru
        _
      // Predicated region
      $region17: #{dense_layer_forward.1} parent=11 // pred_check
        %p231 = pneg %p82
      $region18: #{dense_layer_forward.1} parent=11 // pred_check_branch
        %233 = sbr.rel (%p231) target = $region20
      $region19: #{dense_layer_forward.1} parent=11 // pred_region
        _
      $region20: #{dense_layer_forward.1} parent=11 // pred_fallthru
        _
      // Predicated region
      $region21: #{dense_layer_forward.1} parent=11 // pred_check
        %p234 = pneg %p103
      $region22: #{dense_layer_forward.1} parent=11 // pred_check_branch
        %236 = sbr.rel (%p234) target = $region24
      $region23: #{dense_layer_forward.1} parent=11 // pred_region
        _
      $region24: #{dense_layer_forward.1} parent=11 // pred_fallthru
        _
      // Predicated region
      $region25: #{dense_layer_forward.1} parent=11 // pred_check
        %p237 = pneg %p124
      $region26: #{dense_layer_forward.1} parent=11 // pred_check_branch
        %239 = sbr.rel (%p237) target = $region28
      $region27: #{dense_layer_forward.1} parent=11 // pred_region
        _
      $region28: #{dense_layer_forward.1} parent=11 // pred_fallthru
        _
      // Predicated region
      $region29: #{dense_layer_forward.1} parent=11 // pred_check
        %p240 = pneg %p145
      $region30: #{dense_layer_forward.1} parent=11 // pred_check_branch
        %242 = sbr.rel (%p240) target = $region32
      $region31: #{dense_layer_forward.1} parent=11 // pred_region
        _
      $region32: #{dense_layer_forward.1} parent=11 // pred_fallthru
        _
      // Predicated region
      $region33: #{dense_layer_forward.1} parent=11 // pred_check
        %p243 = pneg %p166
      $region34: #{dense_layer_forward.1} parent=11 // pred_check_branch
        %245 = sbr.rel (%p243) target = $region36
      $region35: #{dense_layer_forward.1} parent=11 // pred_region
        _
      $region36: #{dense_layer_forward.1} parent=11 // pred_fallthru
        _
      // Predicated region
      $region37: #{dense_layer_forward.1} parent=11 // pred_check
        %p246 = pneg %p187
      $region38: #{dense_layer_forward.1} parent=11 // pred_check_branch
        %248 = sbr.rel (%p246) target = $region40
      $region39: #{dense_layer_forward.1} parent=11 // pred_region
        _
      $region40: #{dense_layer_forward.1} parent=11 // pred_fallthru
        _
    $region12: #{dense_layer_forward.1} parent=5 // pred_fallthru
      _
    %p249 = scmp.lt.s32.totalorder %s14, 2
    // Predicated region
    $region41: #{dense_layer_forward.1} parent=5 // pred_check
      %p250 = pneg %p249
    $region42: #{dense_layer_forward.1} parent=5 // pred_check_branch
      %252 = sbr.rel (%p250) target = $region44
    $region43: #{dense_layer_forward.1} parent=5 // pred_region
      // Predicated region
      $region45: #{dense_layer_forward.1} parent=43 // pred_check
        %p253 = pneg %p34
      $region46: #{dense_layer_forward.1} parent=43 // pred_check_branch
        %255 = sbr.rel (%p253) target = $region48
      $region47: #{dense_layer_forward.1} parent=43 // pred_region
        %p256 = scmp.lt.s32.totalorder %s14, 1
        %s257 = scalar_select %p256, %s14, 1
        %s258 = smul.addr %s257, 32
        %s259 = smul.addr %s258, 8
        %s260 = scalar_lea.vmem %s0, %s259
      $region48: #{dense_layer_forward.1} parent=43 // pred_fallthru
        _
    $region44: #{dense_layer_forward.1} parent=5 // pred_fallthru
      _
    %p261 = scmp.le.s32.totalorder 1, %s14
    %p262 = scmp.lt.s32.totalorder %s14, 3
    %p263 = pnand %p261, %p262
    %p264 = pneg %p263
    // Predicated region
    $region49: #{dense_layer_forward.1} parent=5 // pred_check
      _
    $region50: #{dense_layer_forward.1} parent=5 // pred_check_branch
      %266 = sbr.rel (%p263) target = $region52
    $region51: #{dense_layer_forward.1} parent=5 // pred_region
      %s267 = ssub.s32 %s14, 1
      %p268 = scmp.lt.s32.totalorder %s19, 1
      %s269 = scalar_select %p268, %s19, 1
      %s270 = smul.addr %s269, 32
      %s271 = smul.addr %s270, 8
      %s272 = scalar_lea.vmem %s0, %s271
      %p273 = pneg %p40
      %p274 = pneg %p37
      %p275 = pneg %p61
      %p276 = pneg %p58
      %p277 = pneg %p82
      %p278 = pneg %p79
      %p279 = pneg %p103
      %p280 = pneg %p100
      %p281 = pneg %p124
      %p282 = pneg %p121
      %p283 = pneg %p145
      %p284 = pneg %p142
      %p285 = pneg %p166
      %p286 = pneg %p163
      %p287 = pneg %p187
      %p288 = pneg %p184
      %p289 = pneg %p213
      %p290 = pneg %p210
      %p291 = scmp.lt.s32.totalorder %s19, 1
      %s292 = scalar_select %p291, %s19, 1
      %s293 = smul.addr %s292, 32
      %s294 = smul.addr %s293, 8
      %s295 = scalar_lea.vmem %s8, %s294
      %p296 = scmp.lt.s32.totalorder %s19, 1
      %s297 = scalar_select %p296, %s19, 1
      %s298 = smul.addr %s297, 32
      %s299 = smul.addr %s298, 8
      %s300 = scalar_lea.vmem %s0, %s299
      %p301 = scmp.lt.s32.totalorder %s19, 1
      %s302 = scalar_select %p301, %s19, 1
      %s303 = smul.addr %s302, 32
      %s304 = smul.addr %s303, 8
      %s305 = scalar_lea.vmem %s8, %s304
      %v307 = vld [vmem:[%s300] sm:$0xff]
      %v308 = vld [vmem:[%s300 + $0x8] sm:$0xff]
      %v309 = vld [vmem:[%s300 + $0x10] sm:$0xff]
      %v310 = vld [vmem:[%s300 + $0x18] sm:$0xff]
      %v311 = vld [vmem:[%s300 + $0x20] sm:$0xff]
      %v312 = vld [vmem:[%s300 + $0x28] sm:$0xff]
      %v313 = vld [vmem:[%s300 + $0x30] sm:$0xff]
      %v314 = vld [vmem:[%s300 + $0x38] sm:$0xff]
      %v315 = vld [vmem:[%s300 + $0x40] sm:$0xff]
      %v316 = vld [vmem:[%s300 + $0x48] sm:$0xff]
      %v317 = vld [vmem:[%s300 + $0x50] sm:$0xff]
      %v318 = vld [vmem:[%s300 + $0x58] sm:$0xff]
      %v319 = vld [vmem:[%s300 + $0x60] sm:$0xff]
      %v320 = vld [vmem:[%s300 + $0x68] sm:$0xff]
      %v321 = vld [vmem:[%s300 + $0x70] sm:$0xff]
      %v322 = vld [vmem:[%s300 + $0x78] sm:$0xff]
      %v323 = vld [vmem:[%s300 + $0x80] sm:$0xff]
      %v324 = vld [vmem:[%s300 + $0x88] sm:$0xff]
      %v325 = vld [vmem:[%s300 + $0x90] sm:$0xff]
      %v326 = vld [vmem:[%s300 + $0x98] sm:$0xff]
      %v327 = vld [vmem:[%s300 + $0xa0] sm:$0xff]
      %v328 = vld [vmem:[%s300 + $0xa8] sm:$0xff]
      %v329 = vld [vmem:[%s300 + $0xb0] sm:$0xff]
      %v330 = vld [vmem:[%s300 + $0xb8] sm:$0xff]
      %v331 = vld [vmem:[%s300 + $0xc0] sm:$0xff]
      %v332 = vld [vmem:[%s300 + $0xc8] sm:$0xff]
      %v333 = vld [vmem:[%s300 + $0xd0] sm:$0xff]
      %v334 = vld [vmem:[%s300 + $0xd8] sm:$0xff]
      %v335 = vld [vmem:[%s300 + $0xe0] sm:$0xff]
      %v336 = vld [vmem:[%s300 + $0xe8] sm:$0xff]
      %v337 = vld [vmem:[%s300 + $0xf0] sm:$0xff]
      %v338 = vld [vmem:[%s300 + $0xf8] sm:$0xff]
      %vm339 = vcmask 31744
      %340 = vst.msk [vmem:[%s305] sm:$0xff] %vm339, %v307
      %341 = vst.msk [vmem:[%s305 + $0x8] sm:$0xff] %vm339, %v308
      %342 = vst.msk [vmem:[%s305 + $0x10] sm:$0xff] %vm339, %v309
      %343 = vst.msk [vmem:[%s305 + $0x18] sm:$0xff] %vm339, %v310
      %344 = vst.msk [vmem:[%s305 + $0x20] sm:$0xff] %vm339, %v311
      %345 = vst.msk [vmem:[%s305 + $0x28] sm:$0xff] %vm339, %v312
      %346 = vst.msk [vmem:[%s305 + $0x30] sm:$0xff] %vm339, %v313
      %347 = vst.msk [vmem:[%s305 + $0x38] sm:$0xff] %vm339, %v314
      %348 = vst.msk [vmem:[%s305 + $0x40] sm:$0xff] %vm339, %v315
      %349 = vst.msk [vmem:[%s305 + $0x48] sm:$0xff] %vm339, %v316
      %350 = vst.msk [vmem:[%s305 + $0x50] sm:$0xff] %vm339, %v317
      %351 = vst.msk [vmem:[%s305 + $0x58] sm:$0xff] %vm339, %v318
      %352 = vst.msk [vmem:[%s305 + $0x60] sm:$0xff] %vm339, %v319
      %353 = vst.msk [vmem:[%s305 + $0x68] sm:$0xff] %vm339, %v320
      %354 = vst.msk [vmem:[%s305 + $0x70] sm:$0xff] %vm339, %v321
      %355 = vst.msk [vmem:[%s305 + $0x78] sm:$0xff] %vm339, %v322
      %356 = vst.msk [vmem:[%s305 + $0x80] sm:$0xff] %vm339, %v323
      %357 = vst.msk [vmem:[%s305 + $0x88] sm:$0xff] %vm339, %v324
      %358 = vst.msk [vmem:[%s305 + $0x90] sm:$0xff] %vm339, %v325
      %359 = vst.msk [vmem:[%s305 + $0x98] sm:$0xff] %vm339, %v326
      %360 = vst.msk [vmem:[%s305 + $0xa0] sm:$0xff] %vm339, %v327
      %361 = vst.msk [vmem:[%s305 + $0xa8] sm:$0xff] %vm339, %v328
      %362 = vst.msk [vmem:[%s305 + $0xb0] sm:$0xff] %vm339, %v329
      %363 = vst.msk [vmem:[%s305 + $0xb8] sm:$0xff] %vm339, %v330
      %364 = vst.msk [vmem:[%s305 + $0xc0] sm:$0xff] %vm339, %v331
      %365 = vst.msk [vmem:[%s305 + $0xc8] sm:$0xff] %vm339, %v332
      %366 = vst.msk [vmem:[%s305 + $0xd0] sm:$0xff] %vm339, %v333
      %367 = vst.msk [vmem:[%s305 + $0xd8] sm:$0xff] %vm339, %v334
      %368 = vst.msk [vmem:[%s305 + $0xe0] sm:$0xff] %vm339, %v335
      %369 = vst.msk [vmem:[%s305 + $0xe8] sm:$0xff] %vm339, %v336
      %370 = vst.msk [vmem:[%s305 + $0xf0] sm:$0xff] %vm339, %v337
      %371 = vst.msk [vmem:[%s305 + $0xf8] sm:$0xff] %vm339, %v338
      %v372 = vld [vmem:[%s1] sm:$0x1]
      %v374 = vperm.slane %v372, 0
      %v376 = vmul.f32 %v307, %v374
      %v377 = vmul.f32 %v308, %v374
      %v378 = vmul.f32 %v309, %v374
      %v379 = vmul.f32 %v310, %v374
      %v380 = vmul.f32 %v311, %v374
      %v381 = vmul.f32 %v312, %v374
      %v382 = vmul.f32 %v313, %v374
      %v383 = vmul.f32 %v314, %v374
      %v384 = vmul.f32 %v315, %v374
      %v385 = vmul.f32 %v316, %v374
      %v386 = vmul.f32 %v317, %v374
      %v387 = vmul.f32 %v318, %v374
      %v388 = vmul.f32 %v319, %v374
      %v389 = vmul.f32 %v320, %v374
      %v390 = vmul.f32 %v321, %v374
      %v391 = vmul.f32 %v322, %v374
      %v392 = vmul.f32 %v323, %v374
      %v393 = vmul.f32 %v324, %v374
      %v394 = vmul.f32 %v325, %v374
      %v395 = vmul.f32 %v326, %v374
      %v396 = vmul.f32 %v327, %v374
      %v397 = vmul.f32 %v328, %v374
      %v398 = vmul.f32 %v329, %v374
      %v399 = vmul.f32 %v330, %v374
      %v400 = vmul.f32 %v331, %v374
      %v401 = vmul.f32 %v332, %v374
      %v402 = vmul.f32 %v333, %v374
      %v403 = vmul.f32 %v334, %v374
      %v404 = vmul.f32 %v335, %v374
      %v405 = vmul.f32 %v336, %v374
      %v406 = vmul.f32 %v337, %v374
      %v407 = vmul.f32 %v338, %v374
      %v408 = vld [vmem:[%s2] sm:$0x1]
      %v410 = vperm.slane %v408, 0
      %v412 = vadd.f32 %v376, %v410
      %v413 = vadd.f32 %v377, %v410
      %v414 = vadd.f32 %v378, %v410
      %v415 = vadd.f32 %v379, %v410
      %v416 = vadd.f32 %v380, %v410
      %v417 = vadd.f32 %v381, %v410
      %v418 = vadd.f32 %v382, %v410
      %v419 = vadd.f32 %v383, %v410
      %v420 = vadd.f32 %v384, %v410
      %v421 = vadd.f32 %v385, %v410
      %v422 = vadd.f32 %v386, %v410
      %v423 = vadd.f32 %v387, %v410
      %v424 = vadd.f32 %v388, %v410
      %v425 = vadd.f32 %v389, %v410
      %v426 = vadd.f32 %v390, %v410
      %v427 = vadd.f32 %v391, %v410
      %v428 = vadd.f32 %v392, %v410
      %v429 = vadd.f32 %v393, %v410
      %v430 = vadd.f32 %v394, %v410
      %v431 = vadd.f32 %v395, %v410
      %v432 = vadd.f32 %v396, %v410
      %v433 = vadd.f32 %v397, %v410
      %v434 = vadd.f32 %v398, %v410
      %v435 = vadd.f32 %v399, %v410
      %v436 = vadd.f32 %v400, %v410
      %v437 = vadd.f32 %v401, %v410
      %v438 = vadd.f32 %v402, %v410
      %v439 = vadd.f32 %v403, %v410
      %v440 = vadd.f32 %v404, %v410
      %v441 = vadd.f32 %v405, %v410
      %v442 = vadd.f32 %v406, %v410
      %v443 = vadd.f32 %v407, %v410
      %v444 = vmax.f32 %v412, 0.0
      %v445 = vmax.f32 %v413, 0.0
      %v446 = vmax.f32 %v414, 0.0
      %v447 = vmax.f32 %v415, 0.0
      %v448 = vmax.f32 %v416, 0.0
      %v449 = vmax.f32 %v417, 0.0
      %v450 = vmax.f32 %v418, 0.0
      %v451 = vmax.f32 %v419, 0.0
      %v452 = vmax.f32 %v420, 0.0
      %v453 = vmax.f32 %v421, 0.0
      %v454 = vmax.f32 %v422, 0.0
      %v455 = vmax.f32 %v423, 0.0
      %v456 = vmax.f32 %v424, 0.0
      %v457 = vmax.f32 %v425, 0.0
      %v458 = vmax.f32 %v426, 0.0
      %v459 = vmax.f32 %v427, 0.0
      %v460 = vmax.f32 %v428, 0.0
      %v461 = vmax.f32 %v429, 0.0
      %v462 = vmax.f32 %v430, 0.0
      %v463 = vmax.f32 %v431, 0.0
      %v464 = vmax.f32 %v432, 0.0
      %v465 = vmax.f32 %v433, 0.0
      %v466 = vmax.f32 %v434, 0.0
      %v467 = vmax.f32 %v435, 0.0
      %v468 = vmax.f32 %v436, 0.0
      %v469 = vmax.f32 %v437, 0.0
      %v470 = vmax.f32 %v438, 0.0
      %v471 = vmax.f32 %v439, 0.0
      %v472 = vmax.f32 %v440, 0.0
      %v473 = vmax.f32 %v441, 0.0
      %v474 = vmax.f32 %v442, 0.0
      %v475 = vmax.f32 %v443, 0.0
      %v476 = vpack.c.bf16 %v445, %v444
      %v477 = vpack.c.bf16 %v447, %v446
      %v478 = vpack.c.bf16 %v449, %v448
      %v479 = vpack.c.bf16 %v451, %v450
      %v480 = vpack.c.bf16 %v453, %v452
      %v481 = vpack.c.bf16 %v455, %v454
      %v482 = vpack.c.bf16 %v457, %v456
      %v483 = vpack.c.bf16 %v459, %v458
      %v484 = vpack.c.bf16 %v461, %v460
      %v485 = vpack.c.bf16 %v463, %v462
      %v486 = vpack.c.bf16 %v465, %v464
      %v487 = vpack.c.bf16 %v467, %v466
      %v488 = vpack.c.bf16 %v469, %v468
      %v489 = vpack.c.bf16 %v471, %v470
      %v490 = vpack.c.bf16 %v473, %v472
      %v491 = vpack.c.bf16 %v475, %v474
      %v492 = vld [vmem:[%s3] sm:$0x3]
      %v493 = vld [vmem:[%s4] sm:$0x1]
      %v495 = vperm.slane %v493, 0
      %v498 = vsel %vm339, %v476, 0
      %v501 = vsel %vm339, %v477, 0
      %v504 = vsel %vm339, %v478, 0
      %v507 = vsel %vm339, %v479, 0
      %v510 = vsel %vm339, %v480, 0
      %v513 = vsel %vm339, %v481, 0
      %v516 = vsel %vm339, %v482, 0
      %v519 = vsel %vm339, %v483, 0
      %v522 = vsel %vm339, %v484, 0
      %v525 = vsel %vm339, %v485, 0
      %v528 = vsel %vm339, %v486, 0
      %v531 = vsel %vm339, %v487, 0
      %v534 = vsel %vm339, %v488, 0
      %v537 = vsel %vm339, %v489, 0
      %v540 = vsel %vm339, %v490, 0
      %v543 = vsel %vm339, %v491, 0
      %vm545 = vcmask 1041408
      %v547 = vsel %vm545, %v492, 0
      %549 = vmatpush.bf16.msra.mxu0 0
      %550 = vmatpush.bf16.msra.mxu0 0
      %551 = vmatpush.bf16.msra.mxu0 0
      %552 = vmatpush.bf16.msra.mxu0 0
      %553 = vmatpush.bf16.msra.mxu0 0
      %554 = vmatpush.bf16.msra.mxu0 0
      %555 = vmatpush.bf16.msra.mxu0 0
      %556 = vmatpush.bf16.msra.mxu0 %v547
      %557 = vmatmul.bf16.gmra.mxu0 %v498
      %v558 = vpop.f32.mrf.mxu0
      %v559 = vadd.f32 %v495, %v558
      %v560 = vpop.f32.mrf.mxu0
      %v561 = vadd.f32 %v495, %v560
      %562 = vmatmul.bf16.gmra.mxu0 %v501
      %v563 = vpop.f32.mrf.mxu0
      %v564 = vadd.f32 %v495, %v563
      %v565 = vpop.f32.mrf.mxu0
      %v566 = vadd.f32 %v495, %v565
      %567 = vmatmul.bf16.gmra.mxu0 %v504
      %v568 = vpop.f32.mrf.mxu0
      %v569 = vadd.f32 %v495, %v568
      %v570 = vpop.f32.mrf.mxu0
      %v571 = vadd.f32 %v495, %v570
      %572 = vmatmul.bf16.gmra.mxu0 %v507
      %v573 = vpop.f32.mrf.mxu0
      %v574 = vadd.f32 %v495, %v573
      %v575 = vpop.f32.mrf.mxu0
      %v576 = vadd.f32 %v495, %v575
      %577 = vmatmul.bf16.gmra.mxu0 %v510
      %v578 = vpop.f32.mrf.mxu0
      %v579 = vadd.f32 %v495, %v578
      %v580 = vpop.f32.mrf.mxu0
      %v581 = vadd.f32 %v495, %v580
      %582 = vmatmul.bf16.gmra.mxu0 %v513
      %v583 = vpop.f32.mrf.mxu0
      %v584 = vadd.f32 %v495, %v583
      %v585 = vpop.f32.mrf.mxu0
      %v586 = vadd.f32 %v495, %v585
      %587 = vmatmul.bf16.gmra.mxu0 %v516
      %v588 = vpop.f32.mrf.mxu0
      %v589 = vadd.f32 %v495, %v588
      %v590 = vpop.f32.mrf.mxu0
      %v591 = vadd.f32 %v495, %v590
      %592 = vmatmul.bf16.gmra.mxu0 %v519
      %v593 = vpop.f32.mrf.mxu0
      %v594 = vadd.f32 %v495, %v593
      %v595 = vpop.f32.mrf.mxu0
      %v596 = vadd.f32 %v495, %v595
      %597 = vmatmul.bf16.gmra.mxu0 %v522
      %v598 = vpop.f32.mrf.mxu0
      %v599 = vadd.f32 %v495, %v598
      %v600 = vpop.f32.mrf.mxu0
      %v601 = vadd.f32 %v495, %v600
      %602 = vmatmul.bf16.gmra.mxu0 %v525
      %v603 = vpop.f32.mrf.mxu0
      %v604 = vadd.f32 %v495, %v603
      %v605 = vpop.f32.mrf.mxu0
      %v606 = vadd.f32 %v495, %v605
      %607 = vmatmul.bf16.gmra.mxu0 %v528
      %v608 = vpop.f32.mrf.mxu0
      %v609 = vadd.f32 %v495, %v608
      %v610 = vpop.f32.mrf.mxu0
      %v611 = vadd.f32 %v495, %v610
      %612 = vmatmul.bf16.gmra.mxu0 %v531
      %v613 = vpop.f32.mrf.mxu0
      %v614 = vadd.f32 %v495, %v613
      %v615 = vpop.f32.mrf.mxu0
      %v616 = vadd.f32 %v495, %v615
      %617 = vmatmul.bf16.gmra.mxu0 %v534
      %v618 = vpop.f32.mrf.mxu0
      %v619 = vadd.f32 %v495, %v618
      %v620 = vpop.f32.mrf.mxu0
      %v621 = vadd.f32 %v495, %v620
      %622 = vmatmul.bf16.gmra.mxu0 %v537
      %v623 = vpop.f32.mrf.mxu0
      %v624 = vadd.f32 %v495, %v623
      %v625 = vpop.f32.mrf.mxu0
      %v626 = vadd.f32 %v495, %v625
      %627 = vmatmul.bf16.gmra.mxu0 %v540
      %v628 = vpop.f32.mrf.mxu0
      %v629 = vadd.f32 %v495, %v628
      %v630 = vpop.f32.mrf.mxu0
      %v631 = vadd.f32 %v495, %v630
      %632 = vmatmul.bf16.gmra.mxu0 %v543
      %v633 = vpop.f32.mrf.mxu0
      %v634 = vadd.f32 %v495, %v633
      %v635 = vpop.f32.mrf.mxu0
      %v636 = vadd.f32 %v495, %v635
      %637 = vdwg.mxu0
      %v638 = vmax.f32 %v559, 0.0
      %v639 = vmax.f32 %v561, 0.0
      %v640 = vmax.f32 %v564, 0.0
      %v641 = vmax.f32 %v566, 0.0
      %v642 = vmax.f32 %v569, 0.0
      %v643 = vmax.f32 %v571, 0.0
      %v644 = vmax.f32 %v574, 0.0
      %v645 = vmax.f32 %v576, 0.0
      %v646 = vmax.f32 %v579, 0.0
      %v647 = vmax.f32 %v581, 0.0
      %v648 = vmax.f32 %v584, 0.0
      %v649 = vmax.f32 %v586, 0.0
      %v650 = vmax.f32 %v589, 0.0
      %v651 = vmax.f32 %v591, 0.0
      %v652 = vmax.f32 %v594, 0.0
      %v653 = vmax.f32 %v596, 0.0
      %v654 = vmax.f32 %v599, 0.0
      %v655 = vmax.f32 %v601, 0.0
      %v656 = vmax.f32 %v604, 0.0
      %v657 = vmax.f32 %v606, 0.0
      %v658 = vmax.f32 %v609, 0.0
      %v659 = vmax.f32 %v611, 0.0
      %v660 = vmax.f32 %v614, 0.0
      %v661 = vmax.f32 %v616, 0.0
      %v662 = vmax.f32 %v619, 0.0
      %v663 = vmax.f32 %v621, 0.0
      %v664 = vmax.f32 %v624, 0.0
      %v665 = vmax.f32 %v626, 0.0
      %v666 = vmax.f32 %v629, 0.0
      %v667 = vmax.f32 %v631, 0.0
      %v668 = vmax.f32 %v634, 0.0
      %v669 = vmax.f32 %v636, 0.0
      %v670 = vpack.c.bf16 %v639, %v638
      %v671 = vpack.c.bf16 %v641, %v640
      %v672 = vpack.c.bf16 %v643, %v642
      %v673 = vpack.c.bf16 %v645, %v644
      %v674 = vpack.c.bf16 %v647, %v646
      %v675 = vpack.c.bf16 %v649, %v648
      %v676 = vpack.c.bf16 %v651, %v650
      %v677 = vpack.c.bf16 %v653, %v652
      %v678 = vpack.c.bf16 %v655, %v654
      %v679 = vpack.c.bf16 %v657, %v656
      %v680 = vpack.c.bf16 %v659, %v658
      %v681 = vpack.c.bf16 %v661, %v660
      %v682 = vpack.c.bf16 %v663, %v662
      %v683 = vpack.c.bf16 %v665, %v664
      %v684 = vpack.c.bf16 %v667, %v666
      %v685 = vpack.c.bf16 %v669, %v668
      %v686 = vld [vmem:[%s5] sm:$0xf]
      %v687 = vld [vmem:[%s5 + $0x4] sm:$0xf]
      %v688 = vld [vmem:[%s5 + $0x8] sm:$0xf]
      %v689 = vld [vmem:[%s5 + $0xc] sm:$0xf]
      %v694 = vunpack.c.l.b16 %v686
      %v695 = vunpack.c.l.b16 %v687
      %v696 = vunpack.c.l.b16 %v688
      %v697 = vunpack.c.l.b16 %v689
      %v698 = vpack.c.b16 %v695, %v694
      %v699 = vpack.c.b16 %v697, %v696
      %vm702 = vcmask 261120
      %v704 = vsel %vm702, %v670, 0
      %v707 = vsel %vm702, %v671, 0
      %v710 = vsel %vm702, %v672, 0
      %v713 = vsel %vm702, %v673, 0
      %v716 = vsel %vm702, %v674, 0
      %v719 = vsel %vm702, %v675, 0
      %v722 = vsel %vm702, %v676, 0
      %v725 = vsel %vm702, %v677, 0
      %v728 = vsel %vm702, %v678, 0
      %v731 = vsel %vm702, %v679, 0
      %v734 = vsel %vm702, %v680, 0
      %v737 = vsel %vm702, %v681, 0
      %v740 = vsel %vm702, %v682, 0
      %v743 = vsel %vm702, %v683, 0
      %v746 = vsel %vm702, %v684, 0
      %v749 = vsel %vm702, %v685, 0
      %751 = vmatpush.bf16.msra.mxu0 0
      %752 = vmatpush.bf16.msra.mxu0 0
      %753 = vmatpush.bf16.msra.mxu0 0
      %754 = vmatpush.bf16.msra.mxu0 0
      %755 = vmatpush.bf16.msra.mxu0 0
      %756 = vmatpush.bf16.msra.mxu0 0
      %757 = vmatpush.bf16.msra.mxu0 %v699
      %758 = vmatpush.bf16.msra.mxu0 %v698
      %759 = vmatmul.bf16.gmra.mxu0 %v704
      %v760 = vpop.f32.mrf.mxu0
      %v761 = vadd.f32 0.0, %v760
      %v762 = vpop.f32.mrf.mxu0
      %v763 = vadd.f32 0.0, %v762
      %764 = vmatmul.bf16.gmra.mxu0 %v707
      %v765 = vpop.f32.mrf.mxu0
      %v766 = vadd.f32 0.0, %v765
      %v767 = vpop.f32.mrf.mxu0
      %v768 = vadd.f32 0.0, %v767
      %769 = vmatmul.bf16.gmra.mxu0 %v710
      %v770 = vpop.f32.mrf.mxu0
      %v771 = vadd.f32 0.0, %v770
      %v772 = vpop.f32.mrf.mxu0
      %v773 = vadd.f32 0.0, %v772
      %774 = vmatmul.bf16.gmra.mxu0 %v713
      %v775 = vpop.f32.mrf.mxu0
      %v776 = vadd.f32 0.0, %v775
      %v777 = vpop.f32.mrf.mxu0
      %v778 = vadd.f32 0.0, %v777
      %779 = vmatmul.bf16.gmra.mxu0 %v716
      %v780 = vpop.f32.mrf.mxu0
      %v781 = vadd.f32 0.0, %v780
      %v782 = vpop.f32.mrf.mxu0
      %v783 = vadd.f32 0.0, %v782
      %784 = vmatmul.bf16.gmra.mxu0 %v719
      %v785 = vpop.f32.mrf.mxu0
      %v786 = vadd.f32 0.0, %v785
      %v787 = vpop.f32.mrf.mxu0
      %v788 = vadd.f32 0.0, %v787
      %789 = vmatmul.bf16.gmra.mxu0 %v722
      %v790 = vpop.f32.mrf.mxu0
      %v791 = vadd.f32 0.0, %v790
      %v792 = vpop.f32.mrf.mxu0
      %v793 = vadd.f32 0.0, %v792
      %794 = vmatmul.bf16.gmra.mxu0 %v725
      %v795 = vpop.f32.mrf.mxu0
      %v796 = vadd.f32 0.0, %v795
      %v797 = vpop.f32.mrf.mxu0
      %v798 = vadd.f32 0.0, %v797
      %799 = vmatmul.bf16.gmra.mxu0 %v728
      %v800 = vpop.f32.mrf.mxu0
      %v801 = vadd.f32 0.0, %v800
      %v802 = vpop.f32.mrf.mxu0
      %v803 = vadd.f32 0.0, %v802
      %804 = vmatmul.bf16.gmra.mxu0 %v731
      %v805 = vpop.f32.mrf.mxu0
      %v806 = vadd.f32 0.0, %v805
      %v807 = vpop.f32.mrf.mxu0
      %v808 = vadd.f32 0.0, %v807
      %809 = vmatmul.bf16.gmra.mxu0 %v734
      %v810 = vpop.f32.mrf.mxu0
      %v811 = vadd.f32 0.0, %v810
      %v812 = vpop.f32.mrf.mxu0
      %v813 = vadd.f32 0.0, %v812
      %814 = vmatmul.bf16.gmra.mxu0 %v737
      %v815 = vpop.f32.mrf.mxu0
      %v816 = vadd.f32 0.0, %v815
      %v817 = vpop.f32.mrf.mxu0
      %v818 = vadd.f32 0.0, %v817
      %819 = vmatmul.bf16.gmra.mxu0 %v740
      %v820 = vpop.f32.mrf.mxu0
      %v821 = vadd.f32 0.0, %v820
      %v822 = vpop.f32.mrf.mxu0
      %v823 = vadd.f32 0.0, %v822
      %824 = vmatmul.bf16.gmra.mxu0 %v743
      %v825 = vpop.f32.mrf.mxu0
      %v826 = vadd.f32 0.0, %v825
      %v827 = vpop.f32.mrf.mxu0
      %v828 = vadd.f32 0.0, %v827
      %829 = vmatmul.bf16.gmra.mxu0 %v746
      %v830 = vpop.f32.mrf.mxu0
      %v831 = vadd.f32 0.0, %v830
      %v832 = vpop.f32.mrf.mxu0
      %v833 = vadd.f32 0.0, %v832
      %834 = vmatmul.bf16.gmra.mxu0 %v749
      %v835 = vpop.f32.mrf.mxu0
      %v836 = vadd.f32 0.0, %v835
      %v837 = vpop.f32.mrf.mxu0
      %v838 = vadd.f32 0.0, %v837
      %839 = vdwg.mxu0
      %vm840 = vcmask 588800
      %841 = vst.msk [vmem:[#allocation2] sm:$0xff] %vm840, 0.0
      %842 = vst.msk [vmem:[#allocation2 + $0x8] sm:$0xff] %vm840, 0.0
      %843 = vst.msk [vmem:[#allocation2 + $0x10] sm:$0xff] %vm840, 0.0
      %844 = vst.msk [vmem:[#allocation2 + $0x118] sm:$0xff] %vm840, 0.0
      %845 = vst.msk [vmem:[#allocation2 + $0x120] sm:$0xff] %vm840, 0.0
      %846 = vst.msk [vmem:[#allocation2 + $0x128] sm:$0xff] %vm840, 0.0
      %847 = vst.msk [vmem:[#allocation2 + $0x18] sm:$0xff] %vm840, %v761
      %848 = vst.msk [vmem:[#allocation2 + $0x20] sm:$0xff] %vm840, %v763
      %849 = vst.msk [vmem:[#allocation2 + $0x28] sm:$0xff] %vm840, %v766
      %850 = vst.msk [vmem:[#allocation2 + $0x30] sm:$0xff] %vm840, %v768
      %851 = vst.msk [vmem:[#allocation2 + $0x38] sm:$0xff] %vm840, %v771
      %852 = vst.msk [vmem:[#allocation2 + $0x40] sm:$0xff] %vm840, %v773
      %853 = vst.msk [vmem:[#allocation2 + $0x48] sm:$0xff] %vm840, %v776
      %854 = vst.msk [vmem:[#allocation2 + $0x50] sm:$0xff] %vm840, %v778
      %855 = vst.msk [vmem:[#allocation2 + $0x58] sm:$0xff] %vm840, %v781
      %856 = vst.msk [vmem:[#allocation2 + $0x60] sm:$0xff] %vm840, %v783
      %857 = vst.msk [vmem:[#allocation2 + $0x68] sm:$0xff] %vm840, %v786
      %858 = vst.msk [vmem:[#allocation2 + $0x70] sm:$0xff] %vm840, %v788
      %859 = vst.msk [vmem:[#allocation2 + $0x78] sm:$0xff] %vm840, %v791
      %860 = vst.msk [vmem:[#allocation2 + $0x80] sm:$0xff] %vm840, %v793
      %861 = vst.msk [vmem:[#allocation2 + $0x88] sm:$0xff] %vm840, %v796
      %862 = vst.msk [vmem:[#allocation2 + $0x90] sm:$0xff] %vm840, %v798
      %863 = vst.msk [vmem:[#allocation2 + $0x98] sm:$0xff] %vm840, %v801
      %864 = vst.msk [vmem:[#allocation2 + $0xa0] sm:$0xff] %vm840, %v803
      %865 = vst.msk [vmem:[#allocation2 + $0xa8] sm:$0xff] %vm840, %v806
      %866 = vst.msk [vmem:[#allocation2 + $0xb0] sm:$0xff] %vm840, %v808
      %867 = vst.msk [vmem:[#allocation2 + $0xb8] sm:$0xff] %vm840, %v811
      %868 = vst.msk [vmem:[#allocation2 + $0xc0] sm:$0xff] %vm840, %v813
      %869 = vst.msk [vmem:[#allocation2 + $0xc8] sm:$0xff] %vm840, %v816
      %870 = vst.msk [vmem:[#allocation2 + $0xd0] sm:$0xff] %vm840, %v818
      %871 = vst.msk [vmem:[#allocation2 + $0xd8] sm:$0xff] %vm840, %v821
      %872 = vst.msk [vmem:[#allocation2 + $0xe0] sm:$0xff] %vm840, %v823
      %873 = vst.msk [vmem:[#allocation2 + $0xe8] sm:$0xff] %vm840, %v826
      %874 = vst.msk [vmem:[#allocation2 + $0xf0] sm:$0xff] %vm840, %v828
      %875 = vst.msk [vmem:[#allocation2 + $0xf8] sm:$0xff] %vm840, %v831
      %876 = vst.msk [vmem:[#allocation2 + $0x100] sm:$0xff] %vm840, %v833
      %877 = vst.msk [vmem:[#allocation2 + $0x108] sm:$0xff] %vm840, %v836
      %878 = vst.msk [vmem:[#allocation2 + $0x110] sm:$0xff] %vm840, %v838
      %v879 = vld [vmem:[#allocation2 + $0x7] sm:$0xff]
      %v880 = vld [vmem:[#allocation2 + $0xf] sm:$0xff]
      %v881 = vld [vmem:[#allocation2 + $0x17] sm:$0xff]
      %v882 = vld [vmem:[#allocation2 + $0x1f] sm:$0xff]
      %v883 = vld [vmem:[#allocation2 + $0x27] sm:$0xff]
      %v884 = vld [vmem:[#allocation2 + $0x2f] sm:$0xff]
      %v885 = vld [vmem:[#allocation2 + $0x37] sm:$0xff]
      %v886 = vld [vmem:[#allocation2 + $0x3f] sm:$0xff]
      %v887 = vld [vmem:[#allocation2 + $0x47] sm:$0xff]
      %v888 = vld [vmem:[#allocation2 + $0x4f] sm:$0xff]
      %v889 = vld [vmem:[#allocation2 + $0x57] sm:$0xff]
      %v890 = vld [vmem:[#allocation2 + $0x5f] sm:$0xff]
      %v891 = vld [vmem:[#allocation2 + $0x67] sm:$0xff]
      %v892 = vld [vmem:[#allocation2 + $0x6f] sm:$0xff]
      %v893 = vld [vmem:[#allocation2 + $0x77] sm:$0xff]
      %v894 = vld [vmem:[#allocation2 + $0x7f] sm:$0xff]
      %v895 = vld [vmem:[#allocation2 + $0x87] sm:$0xff]
      %v896 = vld [vmem:[#allocation2 + $0x8f] sm:$0xff]
      %v897 = vld [vmem:[#allocation2 + $0x97] sm:$0xff]
      %v898 = vld [vmem:[#allocation2 + $0x9f] sm:$0xff]
      %v899 = vld [vmem:[#allocation2 + $0xa7] sm:$0xff]
      %v900 = vld [vmem:[#allocation2 + $0xaf] sm:$0xff]
      %v901 = vld [vmem:[#allocation2 + $0xb7] sm:$0xff]
      %v902 = vld [vmem:[#allocation2 + $0xbf] sm:$0xff]
      %v903 = vld [vmem:[#allocation2 + $0xc7] sm:$0xff]
      %v904 = vld [vmem:[#allocation2 + $0xcf] sm:$0xff]
      %v905 = vld [vmem:[#allocation2 + $0xd7] sm:$0xff]
      %v906 = vld [vmem:[#allocation2 + $0xdf] sm:$0xff]
      %v907 = vld [vmem:[#allocation2 + $0xe7] sm:$0xff]
      %v908 = vld [vmem:[#allocation2 + $0xef] sm:$0xff]
      %v909 = vld [vmem:[#allocation2 + $0xf7] sm:$0xff]
      %v910 = vld [vmem:[#allocation2 + $0xff] sm:$0xff]
      %v911 = vld [vmem:[#allocation2 + $0x8] sm:$0xff]
      %v912 = vld [vmem:[#allocation2 + $0x10] sm:$0xff]
      %v913 = vld [vmem:[#allocation2 + $0x18] sm:$0xff]
      %v914 = vld [vmem:[#allocation2 + $0x20] sm:$0xff]
      %v915 = vld [vmem:[#allocation2 + $0x28] sm:$0xff]
      %v916 = vld [vmem:[#allocation2 + $0x30] sm:$0xff]
      %v917 = vld [vmem:[#allocation2 + $0x38] sm:$0xff]
      %v918 = vld [vmem:[#allocation2 + $0x40] sm:$0xff]
      %v919 = vld [vmem:[#allocation2 + $0x48] sm:$0xff]
      %v920 = vld [vmem:[#allocation2 + $0x50] sm:$0xff]
      %v921 = vld [vmem:[#allocation2 + $0x58] sm:$0xff]
      %v922 = vld [vmem:[#allocation2 + $0x60] sm:$0xff]
      %v923 = vld [vmem:[#allocation2 + $0x68] sm:$0xff]
      %v924 = vld [vmem:[#allocation2 + $0x70] sm:$0xff]
      %v925 = vld [vmem:[#allocation2 + $0x78] sm:$0xff]
      %v926 = vld [vmem:[#allocation2 + $0x80] sm:$0xff]
      %v927 = vld [vmem:[#allocation2 + $0x88] sm:$0xff]
      %v928 = vld [vmem:[#allocation2 + $0x90] sm:$0xff]
      %v929 = vld [vmem:[#allocation2 + $0x98] sm:$0xff]
      %v930 = vld [vmem:[#allocation2 + $0xa0] sm:$0xff]
      %v931 = vld [vmem:[#allocation2 + $0xa8] sm:$0xff]
      %v932 = vld [vmem:[#allocation2 + $0xb0] sm:$0xff]
      %v933 = vld [vmem:[#allocation2 + $0xb8] sm:$0xff]
      %v934 = vld [vmem:[#allocation2 + $0xc0] sm:$0xff]
      %v935 = vld [vmem:[#allocation2 + $0xc8] sm:$0xff]
      %v936 = vld [vmem:[#allocation2 + $0xd0] sm:$0xff]
      %v937 = vld [vmem:[#allocation2 + $0xd8] sm:$0xff]
      %v938 = vld [vmem:[#allocation2 + $0xe0] sm:$0xff]
      %v939 = vld [vmem:[#allocation2 + $0xe8] sm:$0xff]
      %v940 = vld [vmem:[#allocation2 + $0xf0] sm:$0xff]
      %v941 = vld [vmem:[#allocation2 + $0xf8] sm:$0xff]
      %v942 = vld [vmem:[#allocation2 + $0x100] sm:$0xff]
      %v943 = vld [vmem:[#allocation2 + $0x9] sm:$0xff]
      %v944 = vld [vmem:[#allocation2 + $0x11] sm:$0xff]
      %v945 = vld [vmem:[#allocation2 + $0x19] sm:$0xff]
      %v946 = vld [vmem:[#allocation2 + $0x21] sm:$0xff]
      %v947 = vld [vmem:[#allocation2 + $0x29] sm:$0xff]
      %v948 = vld [vmem:[#allocation2 + $0x31] sm:$0xff]
      %v949 = vld [vmem:[#allocation2 + $0x39] sm:$0xff]
      %v950 = vld [vmem:[#allocation2 + $0x41] sm:$0xff]
      %v951 = vld [vmem:[#allocation2 + $0x49] sm:$0xff]
      %v952 = vld [vmem:[#allocation2 + $0x51] sm:$0xff]
      %v953 = vld [vmem:[#allocation2 + $0x59] sm:$0xff]
      %v954 = vld [vmem:[#allocation2 + $0x61] sm:$0xff]
      %v955 = vld [vmem:[#allocation2 + $0x69] sm:$0xff]
      %v956 = vld [vmem:[#allocation2 + $0x71] sm:$0xff]
      %v957 = vld [vmem:[#allocation2 + $0x79] sm:$0xff]
      %v958 = vld [vmem:[#allocation2 + $0x81] sm:$0xff]
      %v959 = vld [vmem:[#allocation2 + $0x89] sm:$0xff]
      %v960 = vld [vmem:[#allocation2 + $0x91] sm:$0xff]
      %v961 = vld [vmem:[#allocation2 + $0x99] sm:$0xff]
      %v962 = vld [vmem:[#allocation2 + $0xa1] sm:$0xff]
      %v963 = vld [vmem:[#allocation2 + $0xa9] sm:$0xff]
      %v964 = vld [vmem:[#allocation2 + $0xb1] sm:$0xff]
      %v965 = vld [vmem:[#allocation2 + $0xb9] sm:$0xff]
      %v966 = vld [vmem:[#allocation2 + $0xc1] sm:$0xff]
      %v967 = vld [vmem:[#allocation2 + $0xc9] sm:$0xff]
      %v968 = vld [vmem:[#allocation2 + $0xd1] sm:$0xff]
      %v969 = vld [vmem:[#allocation2 + $0xd9] sm:$0xff]
      %v970 = vld [vmem:[#allocation2 + $0xe1] sm:$0xff]
      %v971 = vld [vmem:[#allocation2 + $0xe9] sm:$0xff]
      %v972 = vld [vmem:[#allocation2 + $0xf1] sm:$0xff]
      %v973 = vld [vmem:[#allocation2 + $0xf9] sm:$0xff]
      %v974 = vld [vmem:[#allocation2 + $0x101] sm:$0xff]
      %v975 = vld [vmem:[#allocation2 + $0x107] sm:$0xff]
      %v976 = vld [vmem:[#allocation2 + $0x10f] sm:$0xff]
      %1009 = vrot.lane.b32.xlu0 %v881, 104
      %v1010 = vpop.permute.xlu0 %1009
      %1011 = vrot.lane.b32.xlu0 %v882, 104
      %v1012 = vpop.permute.xlu0 %1011
      %1013 = vrot.lane.b32.xlu0 %v883, 104
      %v1014 = vpop.permute.xlu0 %1013
      %1015 = vrot.lane.b32.xlu0 %v884, 104
      %v1016 = vpop.permute.xlu0 %1015
      %1017 = vrot.lane.b32.xlu0 %v885, 104
      %v1018 = vpop.permute.xlu0 %1017
      %1019 = vrot.lane.b32.xlu0 %v886, 104
      %v1020 = vpop.permute.xlu0 %1019
      %1021 = vrot.lane.b32.xlu0 %v887, 104
      %v1022 = vpop.permute.xlu0 %1021
      %1023 = vrot.lane.b32.xlu0 %v888, 104
      %v1024 = vpop.permute.xlu0 %1023
      %1025 = vrot.lane.b32.xlu0 %v889, 104
      %v1026 = vpop.permute.xlu0 %1025
      %1027 = vrot.lane.b32.xlu0 %v890, 104
      %v1028 = vpop.permute.xlu0 %1027
      %1029 = vrot.lane.b32.xlu0 %v891, 104
      %v1030 = vpop.permute.xlu0 %1029
      %1031 = vrot.lane.b32.xlu0 %v892, 104
      %v1032 = vpop.permute.xlu0 %1031
      %1033 = vrot.lane.b32.xlu0 %v893, 104
      %v1034 = vpop.permute.xlu0 %1033
      %1035 = vrot.lane.b32.xlu0 %v894, 104
      %v1036 = vpop.permute.xlu0 %1035
      %1037 = vrot.lane.b32.xlu0 %v895, 104
      %v1038 = vpop.permute.xlu0 %1037
      %1039 = vrot.lane.b32.xlu0 %v896, 104
      %v1040 = vpop.permute.xlu0 %1039
      %1041 = vrot.lane.b32.xlu0 %v897, 104
      %v1042 = vpop.permute.xlu0 %1041
      %1043 = vrot.lane.b32.xlu0 %v898, 104
      %v1044 = vpop.permute.xlu0 %1043
      %1045 = vrot.lane.b32.xlu0 %v899, 104
      %v1046 = vpop.permute.xlu0 %1045
      %1047 = vrot.lane.b32.xlu0 %v900, 104
      %v1048 = vpop.permute.xlu0 %1047
      %1049 = vrot.lane.b32.xlu0 %v901, 104
      %v1050 = vpop.permute.xlu0 %1049
      %1051 = vrot.lane.b32.xlu0 %v902, 104
      %v1052 = vpop.permute.xlu0 %1051
      %1053 = vrot.lane.b32.xlu0 %v903, 104
      %v1054 = vpop.permute.xlu0 %1053
      %1055 = vrot.lane.b32.xlu0 %v904, 104
      %v1056 = vpop.permute.xlu0 %1055
      %1057 = vrot.lane.b32.xlu0 %v905, 104
      %v1058 = vpop.permute.xlu0 %1057
      %1059 = vrot.lane.b32.xlu0 %v906, 104
      %v1060 = vpop.permute.xlu0 %1059
      %1061 = vrot.lane.b32.xlu0 %v907, 104
      %v1062 = vpop.permute.xlu0 %1061
      %1063 = vrot.lane.b32.xlu0 %v908, 104
      %v1064 = vpop.permute.xlu0 %1063
      %1065 = vrot.lane.b32.xlu0 %v909, 104
      %v1066 = vpop.permute.xlu0 %1065
      %1067 = vrot.lane.b32.xlu0 %v910, 104
      %v1068 = vpop.permute.xlu0 %1067
      %1069 = vrot.lane.b32.xlu0 %v975, 104
      %v1070 = vpop.permute.xlu0 %1069
      %1071 = vrot.lane.b32.xlu0 %v976, 104
      %v1072 = vpop.permute.xlu0 %1071
      %v1105 = vadd.f32 %v879, %v1010
      %v1106 = vadd.f32 %v880, %v1012
      %v1107 = vadd.f32 %v881, %v1014
      %v1108 = vadd.f32 %v882, %v1016
      %v1109 = vadd.f32 %v883, %v1018
      %v1110 = vadd.f32 %v884, %v1020
      %v1111 = vadd.f32 %v885, %v1022
      %v1112 = vadd.f32 %v886, %v1024
      %v1113 = vadd.f32 %v887, %v1026
      %v1114 = vadd.f32 %v888, %v1028
      %v1115 = vadd.f32 %v889, %v1030
      %v1116 = vadd.f32 %v890, %v1032
      %v1117 = vadd.f32 %v891, %v1034
      %v1118 = vadd.f32 %v892, %v1036
      %v1119 = vadd.f32 %v893, %v1038
      %v1120 = vadd.f32 %v894, %v1040
      %v1121 = vadd.f32 %v895, %v1042
      %v1122 = vadd.f32 %v896, %v1044
      %v1123 = vadd.f32 %v897, %v1046
      %v1124 = vadd.f32 %v898, %v1048
      %v1125 = vadd.f32 %v899, %v1050
      %v1126 = vadd.f32 %v900, %v1052
      %v1127 = vadd.f32 %v901, %v1054
      %v1128 = vadd.f32 %v902, %v1056
      %v1129 = vadd.f32 %v903, %v1058
      %v1130 = vadd.f32 %v904, %v1060
      %v1131 = vadd.f32 %v905, %v1062
      %v1132 = vadd.f32 %v906, %v1064
      %v1133 = vadd.f32 %v907, %v1066
      %v1134 = vadd.f32 %v908, %v1068
      %v1135 = vadd.f32 %v909, %v1070
      %v1136 = vadd.f32 %v910, %v1072
      %v1137 = vld [vmem:[#allocation2 + $0x108] sm:$0xff]
      %v1138 = vld [vmem:[#allocation2 + $0x110] sm:$0xff]
      %1171 = vrot.lane.b32.xlu0 %v913, 104
      %v1172 = vpop.permute.xlu0 %1171
      %1173 = vrot.lane.b32.xlu0 %v914, 104
      %v1174 = vpop.permute.xlu0 %1173
      %1175 = vrot.lane.b32.xlu0 %v915, 104
      %v1176 = vpop.permute.xlu0 %1175
      %1177 = vrot.lane.b32.xlu0 %v916, 104
      %v1178 = vpop.permute.xlu0 %1177
      %1179 = vrot.lane.b32.xlu0 %v917, 104
      %v1180 = vpop.permute.xlu0 %1179
      %1181 = vrot.lane.b32.xlu0 %v918, 104
      %v1182 = vpop.permute.xlu0 %1181
      %1183 = vrot.lane.b32.xlu0 %v919, 104
      %v1184 = vpop.permute.xlu0 %1183
      %1185 = vrot.lane.b32.xlu0 %v920, 104
      %v1186 = vpop.permute.xlu0 %1185
      %1187 = vrot.lane.b32.xlu0 %v921, 104
      %v1188 = vpop.permute.xlu0 %1187
      %1189 = vrot.lane.b32.xlu0 %v922, 104
      %v1190 = vpop.permute.xlu0 %1189
      %1191 = vrot.lane.b32.xlu0 %v923, 104
      %v1192 = vpop.permute.xlu0 %1191
      %1193 = vrot.lane.b32.xlu0 %v924, 104
      %v1194 = vpop.permute.xlu0 %1193
      %1195 = vrot.lane.b32.xlu0 %v925, 104
      %v1196 = vpop.permute.xlu0 %1195
      %1197 = vrot.lane.b32.xlu0 %v926, 104
      %v1198 = vpop.permute.xlu0 %1197
      %1199 = vrot.lane.b32.xlu0 %v927, 104
      %v1200 = vpop.permute.xlu0 %1199
      %1201 = vrot.lane.b32.xlu0 %v928, 104
      %v1202 = vpop.permute.xlu0 %1201
      %1203 = vrot.lane.b32.xlu0 %v929, 104
      %v1204 = vpop.permute.xlu0 %1203
      %1205 = vrot.lane.b32.xlu0 %v930, 104
      %v1206 = vpop.permute.xlu0 %1205
      %1207 = vrot.lane.b32.xlu0 %v931, 104
      %v1208 = vpop.permute.xlu0 %1207
      %1209 = vrot.lane.b32.xlu0 %v932, 104
      %v1210 = vpop.permute.xlu0 %1209
      %1211 = vrot.lane.b32.xlu0 %v933, 104
      %v1212 = vpop.permute.xlu0 %1211
      %1213 = vrot.lane.b32.xlu0 %v934, 104
      %v1214 = vpop.permute.xlu0 %1213
      %1215 = vrot.lane.b32.xlu0 %v935, 104
      %v1216 = vpop.permute.xlu0 %1215
      %1217 = vrot.lane.b32.xlu0 %v936, 104
      %v1218 = vpop.permute.xlu0 %1217
      %1219 = vrot.lane.b32.xlu0 %v937, 104
      %v1220 = vpop.permute.xlu0 %1219
      %1221 = vrot.lane.b32.xlu0 %v938, 104
      %v1222 = vpop.permute.xlu0 %1221
      %1223 = vrot.lane.b32.xlu0 %v939, 104
      %v1224 = vpop.permute.xlu0 %1223
      %1225 = vrot.lane.b32.xlu0 %v940, 104
      %v1226 = vpop.permute.xlu0 %1225
      %1227 = vrot.lane.b32.xlu0 %v941, 104
      %v1228 = vpop.permute.xlu0 %1227
      %1229 = vrot.lane.b32.xlu0 %v942, 104
      %v1230 = vpop.permute.xlu0 %1229
      %1231 = vrot.lane.b32.xlu0 %v1137, 104
      %v1232 = vpop.permute.xlu0 %1231
      %1233 = vrot.lane.b32.xlu0 %v1138, 104
      %v1234 = vpop.permute.xlu0 %1233
      %v1267 = vadd.f32 %v911, %v1172
      %v1268 = vadd.f32 %v912, %v1174
      %v1269 = vadd.f32 %v913, %v1176
      %v1270 = vadd.f32 %v914, %v1178
      %v1271 = vadd.f32 %v915, %v1180
      %v1272 = vadd.f32 %v916, %v1182
      %v1273 = vadd.f32 %v917, %v1184
      %v1274 = vadd.f32 %v918, %v1186
      %v1275 = vadd.f32 %v919, %v1188
      %v1276 = vadd.f32 %v920, %v1190
      %v1277 = vadd.f32 %v921, %v1192
      %v1278 = vadd.f32 %v922, %v1194
      %v1279 = vadd.f32 %v923, %v1196
      %v1280 = vadd.f32 %v924, %v1198
      %v1281 = vadd.f32 %v925, %v1200
      %v1282 = vadd.f32 %v926, %v1202
      %v1283 = vadd.f32 %v927, %v1204
      %v1284 = vadd.f32 %v928, %v1206
      %v1285 = vadd.f32 %v929, %v1208
      %v1286 = vadd.f32 %v930, %v1210
      %v1287 = vadd.f32 %v931, %v1212
      %v1288 = vadd.f32 %v932, %v1214
      %v1289 = vadd.f32 %v933, %v1216
      %v1290 = vadd.f32 %v934, %v1218
      %v1291 = vadd.f32 %v935, %v1220
      %v1292 = vadd.f32 %v936, %v1222
      %v1293 = vadd.f32 %v937, %v1224
      %v1294 = vadd.f32 %v938, %v1226
      %v1295 = vadd.f32 %v939, %v1228
      %v1296 = vadd.f32 %v940, %v1230
      %v1297 = vadd.f32 %v941, %v1232
      %v1298 = vadd.f32 %v942, %v1234
      %v1299 = vld [vmem:[#allocation2 + $0x109] sm:$0xff]
      %v1300 = vld [vmem:[#allocation2 + $0x111] sm:$0xff]
      %1333 = vrot.lane.b32.xlu0 %v945, 104
      %v1334 = vpop.permute.xlu0 %1333
      %1335 = vrot.lane.b32.xlu0 %v946, 104
      %v1336 = vpop.permute.xlu0 %1335
      %1337 = vrot.lane.b32.xlu0 %v947, 104
      %v1338 = vpop.permute.xlu0 %1337
      %1339 = vrot.lane.b32.xlu0 %v948, 104
      %v1340 = vpop.permute.xlu0 %1339
      %1341 = vrot.lane.b32.xlu0 %v949, 104
      %v1342 = vpop.permute.xlu0 %1341
      %1343 = vrot.lane.b32.xlu0 %v950, 104
      %v1344 = vpop.permute.xlu0 %1343
      %1345 = vrot.lane.b32.xlu0 %v951, 104
      %v1346 = vpop.permute.xlu0 %1345
      %1347 = vrot.lane.b32.xlu0 %v952, 104
      %v1348 = vpop.permute.xlu0 %1347
      %1349 = vrot.lane.b32.xlu0 %v953, 104
      %v1350 = vpop.permute.xlu0 %1349
      %1351 = vrot.lane.b32.xlu0 %v954, 104
      %v1352 = vpop.permute.xlu0 %1351
      %1353 = vrot.lane.b32.xlu0 %v955, 104
      %v1354 = vpop.permute.xlu0 %1353
      %1355 = vrot.lane.b32.xlu0 %v956, 104
      %v1356 = vpop.permute.xlu0 %1355
      %1357 = vrot.lane.b32.xlu0 %v957, 104
      %v1358 = vpop.permute.xlu0 %1357
      %1359 = vrot.lane.b32.xlu0 %v958, 104
      %v1360 = vpop.permute.xlu0 %1359
      %1361 = vrot.lane.b32.xlu0 %v959, 104
      %v1362 = vpop.permute.xlu0 %1361
      %1363 = vrot.lane.b32.xlu0 %v960, 104
      %v1364 = vpop.permute.xlu0 %1363
      %1365 = vrot.lane.b32.xlu0 %v961, 104
      %v1366 = vpop.permute.xlu0 %1365
      %1367 = vrot.lane.b32.xlu0 %v962, 104
      %v1368 = vpop.permute.xlu0 %1367
      %1369 = vrot.lane.b32.xlu0 %v963, 104
      %v1370 = vpop.permute.xlu0 %1369
      %1371 = vrot.lane.b32.xlu0 %v964, 104
      %v1372 = vpop.permute.xlu0 %1371
      %1373 = vrot.lane.b32.xlu0 %v965, 104
      %v1374 = vpop.permute.xlu0 %1373
      %1375 = vrot.lane.b32.xlu0 %v966, 104
      %v1376 = vpop.permute.xlu0 %1375
      %1377 = vrot.lane.b32.xlu0 %v967, 104
      %v1378 = vpop.permute.xlu0 %1377
      %1379 = vrot.lane.b32.xlu0 %v968, 104
      %v1380 = vpop.permute.xlu0 %1379
      %1381 = vrot.lane.b32.xlu0 %v969, 104
      %v1382 = vpop.permute.xlu0 %1381
      %1383 = vrot.lane.b32.xlu0 %v970, 104
      %v1384 = vpop.permute.xlu0 %1383
      %1385 = vrot.lane.b32.xlu0 %v971, 104
      %v1386 = vpop.permute.xlu0 %1385
      %1387 = vrot.lane.b32.xlu0 %v972, 104
      %v1388 = vpop.permute.xlu0 %1387
      %1389 = vrot.lane.b32.xlu0 %v973, 104
      %v1390 = vpop.permute.xlu0 %1389
      %1391 = vrot.lane.b32.xlu0 %v974, 104
      %v1392 = vpop.permute.xlu0 %1391
      %1393 = vrot.lane.b32.xlu0 %v1299, 104
      %v1394 = vpop.permute.xlu0 %1393
      %1395 = vrot.lane.b32.xlu0 %v1300, 104
      %v1396 = vpop.permute.xlu0 %1395
      %v1429 = vadd.f32 %v943, %v1334
      %v1430 = vadd.f32 %v944, %v1336
      %v1431 = vadd.f32 %v945, %v1338
      %v1432 = vadd.f32 %v946, %v1340
      %v1433 = vadd.f32 %v947, %v1342
      %v1434 = vadd.f32 %v948, %v1344
      %v1435 = vadd.f32 %v949, %v1346
      %v1436 = vadd.f32 %v950, %v1348
      %v1437 = vadd.f32 %v951, %v1350
      %v1438 = vadd.f32 %v952, %v1352
      %v1439 = vadd.f32 %v953, %v1354
      %v1440 = vadd.f32 %v954, %v1356
      %v1441 = vadd.f32 %v955, %v1358
      %v1442 = vadd.f32 %v956, %v1360
      %v1443 = vadd.f32 %v957, %v1362
      %v1444 = vadd.f32 %v958, %v1364
      %v1445 = vadd.f32 %v959, %v1366
      %v1446 = vadd.f32 %v960, %v1368
      %v1447 = vadd.f32 %v961, %v1370
      %v1448 = vadd.f32 %v962, %v1372
      %v1449 = vadd.f32 %v963, %v1374
      %v1450 = vadd.f32 %v964, %v1376
      %v1451 = vadd.f32 %v965, %v1378
      %v1452 = vadd.f32 %v966, %v1380
      %v1453 = vadd.f32 %v967, %v1382
      %v1454 = vadd.f32 %v968, %v1384
      %v1455 = vadd.f32 %v969, %v1386
      %v1456 = vadd.f32 %v970, %v1388
      %v1457 = vadd.f32 %v971, %v1390
      %v1458 = vadd.f32 %v972, %v1392
      %v1459 = vadd.f32 %v973, %v1394
      %v1460 = vadd.f32 %v974, %v1396
      %v1461 = vld [vmem:[#allocation2 + $0x117] sm:$0xff]
      %v1462 = vld [vmem:[#allocation2 + $0x11f] sm:$0xff]
      %1465 = vrot.lane.b32.xlu0 %v883, 80
      %v1466 = vpop.permute.xlu0 %1465
      %1467 = vrot.lane.b32.xlu0 %v884, 80
      %v1468 = vpop.permute.xlu0 %1467
      %1469 = vrot.lane.b32.xlu0 %v885, 80
      %v1470 = vpop.permute.xlu0 %1469
      %1471 = vrot.lane.b32.xlu0 %v886, 80
      %v1472 = vpop.permute.xlu0 %1471
      %1473 = vrot.lane.b32.xlu0 %v887, 80
      %v1474 = vpop.permute.xlu0 %1473
      %1475 = vrot.lane.b32.xlu0 %v888, 80
      %v1476 = vpop.permute.xlu0 %1475
      %1477 = vrot.lane.b32.xlu0 %v889, 80
      %v1478 = vpop.permute.xlu0 %1477
      %1479 = vrot.lane.b32.xlu0 %v890, 80
      %v1480 = vpop.permute.xlu0 %1479
      %1481 = vrot.lane.b32.xlu0 %v891, 80
      %v1482 = vpop.permute.xlu0 %1481
      %1483 = vrot.lane.b32.xlu0 %v892, 80
      %v1484 = vpop.permute.xlu0 %1483
      %1485 = vrot.lane.b32.xlu0 %v893, 80
      %v1486 = vpop.permute.xlu0 %1485
      %1487 = vrot.lane.b32.xlu0 %v894, 80
      %v1488 = vpop.permute.xlu0 %1487
      %1489 = vrot.lane.b32.xlu0 %v895, 80
      %v1490 = vpop.permute.xlu0 %1489
      %1491 = vrot.lane.b32.xlu0 %v896, 80
      %v1492 = vpop.permute.xlu0 %1491
      %1493 = vrot.lane.b32.xlu0 %v897, 80
      %v1494 = vpop.permute.xlu0 %1493
      %1495 = vrot.lane.b32.xlu0 %v898, 80
      %v1496 = vpop.permute.xlu0 %1495
      %1497 = vrot.lane.b32.xlu0 %v899, 80
      %v1498 = vpop.permute.xlu0 %1497
      %1499 = vrot.lane.b32.xlu0 %v900, 80
      %v1500 = vpop.permute.xlu0 %1499
      %1501 = vrot.lane.b32.xlu0 %v901, 80
      %v1502 = vpop.permute.xlu0 %1501
      %1503 = vrot.lane.b32.xlu0 %v902, 80
      %v1504 = vpop.permute.xlu0 %1503
      %1505 = vrot.lane.b32.xlu0 %v903, 80
      %v1506 = vpop.permute.xlu0 %1505
      %1507 = vrot.lane.b32.xlu0 %v904, 80
      %v1508 = vpop.permute.xlu0 %1507
      %1509 = vrot.lane.b32.xlu0 %v905, 80
      %v1510 = vpop.permute.xlu0 %1509
      %1511 = vrot.lane.b32.xlu0 %v906, 80
      %v1512 = vpop.permute.xlu0 %1511
      %1513 = vrot.lane.b32.xlu0 %v907, 80
      %v1514 = vpop.permute.xlu0 %1513
      %1515 = vrot.lane.b32.xlu0 %v908, 80
      %v1516 = vpop.permute.xlu0 %1515
      %1517 = vrot.lane.b32.xlu0 %v909, 80
      %v1518 = vpop.permute.xlu0 %1517
      %1519 = vrot.lane.b32.xlu0 %v910, 80
      %v1520 = vpop.permute.xlu0 %1519
      %1521 = vrot.lane.b32.xlu0 %v975, 80
      %v1522 = vpop.permute.xlu0 %1521
      %1523 = vrot.lane.b32.xlu0 %v976, 80
      %v1524 = vpop.permute.xlu0 %1523
      %1525 = vrot.lane.b32.xlu0 %v1461, 80
      %v1526 = vpop.permute.xlu0 %1525
      %1527 = vrot.lane.b32.xlu0 %v1462, 80
      %v1528 = vpop.permute.xlu0 %1527
      %v1561 = vadd.f32 %v1105, %v1466
      %v1562 = vadd.f32 %v1106, %v1468
      %v1563 = vadd.f32 %v1107, %v1470
      %v1564 = vadd.f32 %v1108, %v1472
      %v1565 = vadd.f32 %v1109, %v1474
      %v1566 = vadd.f32 %v1110, %v1476
      %v1567 = vadd.f32 %v1111, %v1478
      %v1568 = vadd.f32 %v1112, %v1480
      %v1569 = vadd.f32 %v1113, %v1482
      %v1570 = vadd.f32 %v1114, %v1484
      %v1571 = vadd.f32 %v1115, %v1486
      %v1572 = vadd.f32 %v1116, %v1488
      %v1573 = vadd.f32 %v1117, %v1490
      %v1574 = vadd.f32 %v1118, %v1492
      %v1575 = vadd.f32 %v1119, %v1494
      %v1576 = vadd.f32 %v1120, %v1496
      %v1577 = vadd.f32 %v1121, %v1498
      %v1578 = vadd.f32 %v1122, %v1500
      %v1579 = vadd.f32 %v1123, %v1502
      %v1580 = vadd.f32 %v1124, %v1504
      %v1581 = vadd.f32 %v1125, %v1506
      %v1582 = vadd.f32 %v1126, %v1508
      %v1583 = vadd.f32 %v1127, %v1510
      %v1584 = vadd.f32 %v1128, %v1512
      %v1585 = vadd.f32 %v1129, %v1514
      %v1586 = vadd.f32 %v1130, %v1516
      %v1587 = vadd.f32 %v1131, %v1518
      %v1588 = vadd.f32 %v1132, %v1520
      %v1589 = vadd.f32 %v1133, %v1522
      %v1590 = vadd.f32 %v1134, %v1524
      %v1591 = vadd.f32 %v1135, %v1526
      %v1592 = vadd.f32 %v1136, %v1528
      %v1593 = vld [vmem:[#allocation2 + $0x118] sm:$0xff]
      %v1594 = vld [vmem:[#allocation2 + $0x120] sm:$0xff]
      %1597 = vrot.lane.b32.xlu0 %v915, 80
      %v1598 = vpop.permute.xlu0 %1597
      %1599 = vrot.lane.b32.xlu0 %v916, 80
      %v1600 = vpop.permute.xlu0 %1599
      %1601 = vrot.lane.b32.xlu0 %v917, 80
      %v1602 = vpop.permute.xlu0 %1601
      %1603 = vrot.lane.b32.xlu0 %v918, 80
      %v1604 = vpop.permute.xlu0 %1603
      %1605 = vrot.lane.b32.xlu0 %v919, 80
      %v1606 = vpop.permute.xlu0 %1605
      %1607 = vrot.lane.b32.xlu0 %v920, 80
      %v1608 = vpop.permute.xlu0 %1607
      %1609 = vrot.lane.b32.xlu0 %v921, 80
      %v1610 = vpop.permute.xlu0 %1609
      %1611 = vrot.lane.b32.xlu0 %v922, 80
      %v1612 = vpop.permute.xlu0 %1611
      %1613 = vrot.lane.b32.xlu0 %v923, 80
      %v1614 = vpop.permute.xlu0 %1613
      %1615 = vrot.lane.b32.xlu0 %v924, 80
      %v1616 = vpop.permute.xlu0 %1615
      %1617 = vrot.lane.b32.xlu0 %v925, 80
      %v1618 = vpop.permute.xlu0 %1617
      %1619 = vrot.lane.b32.xlu0 %v926, 80
      %v1620 = vpop.permute.xlu0 %1619
      %1621 = vrot.lane.b32.xlu0 %v927, 80
      %v1622 = vpop.permute.xlu0 %1621
      %1623 = vrot.lane.b32.xlu0 %v928, 80
      %v1624 = vpop.permute.xlu0 %1623
      %1625 = vrot.lane.b32.xlu0 %v929, 80
      %v1626 = vpop.permute.xlu0 %1625
      %1627 = vrot.lane.b32.xlu0 %v930, 80
      %v1628 = vpop.permute.xlu0 %1627
      %1629 = vrot.lane.b32.xlu0 %v931, 80
      %v1630 = vpop.permute.xlu0 %1629
      %1631 = vrot.lane.b32.xlu0 %v932, 80
      %v1632 = vpop.permute.xlu0 %1631
      %1633 = vrot.lane.b32.xlu0 %v933, 80
      %v1634 = vpop.permute.xlu0 %1633
      %1635 = vrot.lane.b32.xlu0 %v934, 80
      %v1636 = vpop.permute.xlu0 %1635
      %1637 = vrot.lane.b32.xlu0 %v935, 80
      %v1638 = vpop.permute.xlu0 %1637
      %1639 = vrot.lane.b32.xlu0 %v936, 80
      %v1640 = vpop.permute.xlu0 %1639
      %1641 = vrot.lane.b32.xlu0 %v937, 80
      %v1642 = vpop.permute.xlu0 %1641
      %1643 = vrot.lane.b32.xlu0 %v938, 80
      %v1644 = vpop.permute.xlu0 %1643
      %1645 = vrot.lane.b32.xlu0 %v939, 80
      %v1646 = vpop.permute.xlu0 %1645
      %1647 = vrot.lane.b32.xlu0 %v940, 80
      %v1648 = vpop.permute.xlu0 %1647
      %1649 = vrot.lane.b32.xlu0 %v941, 80
      %v1650 = vpop.permute.xlu0 %1649
      %1651 = vrot.lane.b32.xlu0 %v942, 80
      %v1652 = vpop.permute.xlu0 %1651
      %1653 = vrot.lane.b32.xlu0 %v1137, 80
      %v1654 = vpop.permute.xlu0 %1653
      %1655 = vrot.lane.b32.xlu0 %v1138, 80
      %v1656 = vpop.permute.xlu0 %1655
      %1657 = vrot.lane.b32.xlu0 %v1593, 80
      %v1658 = vpop.permute.xlu0 %1657
      %1659 = vrot.lane.b32.xlu0 %v1594, 80
      %v1660 = vpop.permute.xlu0 %1659
      %v1693 = vadd.f32 %v1267, %v1598
      %v1694 = vadd.f32 %v1268, %v1600
      %v1695 = vadd.f32 %v1269, %v1602
      %v1696 = vadd.f32 %v1270, %v1604
      %v1697 = vadd.f32 %v1271, %v1606
      %v1698 = vadd.f32 %v1272, %v1608
      %v1699 = vadd.f32 %v1273, %v1610
      %v1700 = vadd.f32 %v1274, %v1612
      %v1701 = vadd.f32 %v1275, %v1614
      %v1702 = vadd.f32 %v1276, %v1616
      %v1703 = vadd.f32 %v1277, %v1618
      %v1704 = vadd.f32 %v1278, %v1620
      %v1705 = vadd.f32 %v1279, %v1622
      %v1706 = vadd.f32 %v1280, %v1624
      %v1707 = vadd.f32 %v1281, %v1626
      %v1708 = vadd.f32 %v1282, %v1628
      %v1709 = vadd.f32 %v1283, %v1630
      %v1710 = vadd.f32 %v1284, %v1632
      %v1711 = vadd.f32 %v1285, %v1634
      %v1712 = vadd.f32 %v1286, %v1636
      %v1713 = vadd.f32 %v1287, %v1638
      %v1714 = vadd.f32 %v1288, %v1640
      %v1715 = vadd.f32 %v1289, %v1642
      %v1716 = vadd.f32 %v1290, %v1644
      %v1717 = vadd.f32 %v1291, %v1646
      %v1718 = vadd.f32 %v1292, %v1648
      %v1719 = vadd.f32 %v1293, %v1650
      %v1720 = vadd.f32 %v1294, %v1652
      %v1721 = vadd.f32 %v1295, %v1654
      %v1722 = vadd.f32 %v1296, %v1656
      %v1723 = vadd.f32 %v1297, %v1658
      %v1724 = vadd.f32 %v1298, %v1660
      %v1725 = vld [vmem:[#allocation2 + $0x119] sm:$0xff]
      %v1726 = vld [vmem:[#allocation2 + $0x121] sm:$0xff]
      %1729 = vrot.lane.b32.xlu0 %v947, 80
      %v1730 = vpop.permute.xlu0 %1729
      %1731 = vrot.lane.b32.xlu0 %v948, 80
      %v1732 = vpop.permute.xlu0 %1731
      %1733 = vrot.lane.b32.xlu0 %v949, 80
      %v1734 = vpop.permute.xlu0 %1733
      %1735 = vrot.lane.b32.xlu0 %v950, 80
      %v1736 = vpop.permute.xlu0 %1735
      %1737 = vrot.lane.b32.xlu0 %v951, 80
      %v1738 = vpop.permute.xlu0 %1737
      %1739 = vrot.lane.b32.xlu0 %v952, 80
      %v1740 = vpop.permute.xlu0 %1739
      %1741 = vrot.lane.b32.xlu0 %v953, 80
      %v1742 = vpop.permute.xlu0 %1741
      %1743 = vrot.lane.b32.xlu0 %v954, 80
      %v1744 = vpop.permute.xlu0 %1743
      %1745 = vrot.lane.b32.xlu0 %v955, 80
      %v1746 = vpop.permute.xlu0 %1745
      %1747 = vrot.lane.b32.xlu0 %v956, 80
      %v1748 = vpop.permute.xlu0 %1747
      %1749 = vrot.lane.b32.xlu0 %v957, 80
      %v1750 = vpop.permute.xlu0 %1749
      %1751 = vrot.lane.b32.xlu0 %v958, 80
      %v1752 = vpop.permute.xlu0 %1751
      %1753 = vrot.lane.b32.xlu0 %v959, 80
      %v1754 = vpop.permute.xlu0 %1753
      %1755 = vrot.lane.b32.xlu0 %v960, 80
      %v1756 = vpop.permute.xlu0 %1755
      %1757 = vrot.lane.b32.xlu0 %v961, 80
      %v1758 = vpop.permute.xlu0 %1757
      %1759 = vrot.lane.b32.xlu0 %v962, 80
      %v1760 = vpop.permute.xlu0 %1759
      %1761 = vrot.lane.b32.xlu0 %v963, 80
      %v1762 = vpop.permute.xlu0 %1761
      %1763 = vrot.lane.b32.xlu0 %v964, 80
      %v1764 = vpop.permute.xlu0 %1763
      %1765 = vrot.lane.b32.xlu0 %v965, 80
      %v1766 = vpop.permute.xlu0 %1765
      %1767 = vrot.lane.b32.xlu0 %v966, 80
      %v1768 = vpop.permute.xlu0 %1767
      %1769 = vrot.lane.b32.xlu0 %v967, 80
      %v1770 = vpop.permute.xlu0 %1769
      %1771 = vrot.lane.b32.xlu0 %v968, 80
      %v1772 = vpop.permute.xlu0 %1771
      %1773 = vrot.lane.b32.xlu0 %v969, 80
      %v1774 = vpop.permute.xlu0 %1773
      %1775 = vrot.lane.b32.xlu0 %v970, 80
      %v1776 = vpop.permute.xlu0 %1775
      %1777 = vrot.lane.b32.xlu0 %v971, 80
      %v1778 = vpop.permute.xlu0 %1777
      %1779 = vrot.lane.b32.xlu0 %v972, 80
      %v1780 = vpop.permute.xlu0 %1779
      %1781 = vrot.lane.b32.xlu0 %v973, 80
      %v1782 = vpop.permute.xlu0 %1781
      %1783 = vrot.lane.b32.xlu0 %v974, 80
      %v1784 = vpop.permute.xlu0 %1783
      %1785 = vrot.lane.b32.xlu0 %v1299, 80
      %v1786 = vpop.permute.xlu0 %1785
      %1787 = vrot.lane.b32.xlu0 %v1300, 80
      %v1788 = vpop.permute.xlu0 %1787
      %1789 = vrot.lane.b32.xlu0 %v1725, 80
      %v1790 = vpop.permute.xlu0 %1789
      %1791 = vrot.lane.b32.xlu0 %v1726, 80
      %v1792 = vpop.permute.xlu0 %1791
      %v1825 = vadd.f32 %v1429, %v1730
      %v1826 = vadd.f32 %v1430, %v1732
      %v1827 = vadd.f32 %v1431, %v1734
      %v1828 = vadd.f32 %v1432, %v1736
      %v1829 = vadd.f32 %v1433, %v1738
      %v1830 = vadd.f32 %v1434, %v1740
      %v1831 = vadd.f32 %v1435, %v1742
      %v1832 = vadd.f32 %v1436, %v1744
      %v1833 = vadd.f32 %v1437, %v1746
      %v1834 = vadd.f32 %v1438, %v1748
      %v1835 = vadd.f32 %v1439, %v1750
      %v1836 = vadd.f32 %v1440, %v1752
      %v1837 = vadd.f32 %v1441, %v1754
      %v1838 = vadd.f32 %v1442, %v1756
      %v1839 = vadd.f32 %v1443, %v1758
      %v1840 = vadd.f32 %v1444, %v1760
      %v1841 = vadd.f32 %v1445, %v1762
      %v1842 = vadd.f32 %v1446, %v1764
      %v1843 = vadd.f32 %v1447, %v1766
      %v1844 = vadd.f32 %v1448, %v1768
      %v1845 = vadd.f32 %v1449, %v1770
      %v1846 = vadd.f32 %v1450, %v1772
      %v1847 = vadd.f32 %v1451, %v1774
      %v1848 = vadd.f32 %v1452, %v1776
      %v1849 = vadd.f32 %v1453, %v1778
      %v1850 = vadd.f32 %v1454, %v1780
      %v1851 = vadd.f32 %v1455, %v1782
      %v1852 = vadd.f32 %v1456, %v1784
      %v1853 = vadd.f32 %v1457, %v1786
      %v1854 = vadd.f32 %v1458, %v1788
      %v1855 = vadd.f32 %v1459, %v1790
      %v1856 = vadd.f32 %v1460, %v1792
      %v1857 = vld [vmem:[%s6] sm:$0xff]
      %v1858 = vld [vmem:[%s6 + $0x8] sm:$0xff]
      %v1859 = vld [vmem:[%s6 + $0x10] sm:$0xff]
      %v1860 = vld [vmem:[%s6 + $0x18] sm:$0xff]
      %v1861 = vld [vmem:[%s6 + $0x20] sm:$0xff]
      %v1862 = vld [vmem:[%s6 + $0x28] sm:$0xff]
      %v1863 = vld [vmem:[%s6 + $0x30] sm:$0xff]
      %v1864 = vld [vmem:[%s6 + $0x38] sm:$0xff]
      %v1865 = vld [vmem:[%s6 + $0x40] sm:$0xff]
      %v1866 = vld [vmem:[%s6 + $0x48] sm:$0xff]
      %v1867 = vld [vmem:[%s6 + $0x50] sm:$0xff]
      %v1868 = vld [vmem:[%s6 + $0x58] sm:$0xff]
      %v1869 = vld [vmem:[%s6 + $0x60] sm:$0xff]
      %v1870 = vld [vmem:[%s6 + $0x68] sm:$0xff]
      %v1871 = vld [vmem:[%s6 + $0x70] sm:$0xff]
      %v1872 = vld [vmem:[%s6 + $0x78] sm:$0xff]
      %v1873 = vld [vmem:[%s6 + $0x80] sm:$0xff]
      %v1874 = vld [vmem:[%s6 + $0x88] sm:$0xff]
      %v1875 = vld [vmem:[%s6 + $0x90] sm:$0xff]
      %v1876 = vld [vmem:[%s6 + $0x98] sm:$0xff]
      %v1877 = vld [vmem:[%s6 + $0xa0] sm:$0xff]
      %v1878 = vld [vmem:[%s6 + $0xa8] sm:$0xff]
      %v1879 = vld [vmem:[%s6 + $0xb0] sm:$0xff]
      %v1880 = vld [vmem:[%s6 + $0xb8] sm:$0xff]
      %v1881 = vld [vmem:[%s6 + $0xc0] sm:$0xff]
      %v1882 = vld [vmem:[%s6 + $0xc8] sm:$0xff]
      %v1883 = vld [vmem:[%s6 + $0xd0] sm:$0xff]
      %v1884 = vld [vmem:[%s6 + $0xd8] sm:$0xff]
      %v1885 = vld [vmem:[%s6 + $0xe0] sm:$0xff]
      %v1886 = vld [vmem:[%s6 + $0xe8] sm:$0xff]
      %v1887 = vld [vmem:[%s6 + $0xf0] sm:$0xff]
      %v1888 = vld [vmem:[%s6 + $0xf8] sm:$0xff]
      %1890 = vset.pattern.permute.xlu0 0
      %1891 = vperm.xlu0 %1890, %v1857
      %v1892 = vpop.permute.xlu0 %1891
      %1895 = vset.pattern.permute.xlu0 0
      %1896 = vperm.xlu0 %1895, %v1858
      %v1897 = vpop.permute.xlu0 %1896
      %1900 = vset.pattern.permute.xlu0 0
      %1901 = vperm.xlu0 %1900, %v1859
      %v1902 = vpop.permute.xlu0 %1901
      %1905 = vset.pattern.permute.xlu0 0
      %1906 = vperm.xlu0 %1905, %v1860
      %v1907 = vpop.permute.xlu0 %1906
      %1910 = vset.pattern.permute.xlu0 0
      %1911 = vperm.xlu0 %1910, %v1861
      %v1912 = vpop.permute.xlu0 %1911
      %1915 = vset.pattern.permute.xlu0 0
      %1916 = vperm.xlu0 %1915, %v1862
      %v1917 = vpop.permute.xlu0 %1916
      %1920 = vset.pattern.permute.xlu0 0
      %1921 = vperm.xlu0 %1920, %v1863
      %v1922 = vpop.permute.xlu0 %1921
      %1925 = vset.pattern.permute.xlu0 0
      %1926 = vperm.xlu0 %1925, %v1864
      %v1927 = vpop.permute.xlu0 %1926
      %1930 = vset.pattern.permute.xlu0 0
      %1931 = vperm.xlu0 %1930, %v1865
      %v1932 = vpop.permute.xlu0 %1931
      %1935 = vset.pattern.permute.xlu0 0
      %1936 = vperm.xlu0 %1935, %v1866
      %v1937 = vpop.permute.xlu0 %1936
      %1940 = vset.pattern.permute.xlu0 0
      %1941 = vperm.xlu0 %1940, %v1867
      %v1942 = vpop.permute.xlu0 %1941
      %1945 = vset.pattern.permute.xlu0 0
      %1946 = vperm.xlu0 %1945, %v1868
      %v1947 = vpop.permute.xlu0 %1946
      %1950 = vset.pattern.permute.xlu0 0
      %1951 = vperm.xlu0 %1950, %v1869
      %v1952 = vpop.permute.xlu0 %1951
      %1955 = vset.pattern.permute.xlu0 0
      %1956 = vperm.xlu0 %1955, %v1870
      %v1957 = vpop.permute.xlu0 %1956
      %1960 = vset.pattern.permute.xlu0 0
      %1961 = vperm.xlu0 %1960, %v1871
      %v1962 = vpop.permute.xlu0 %1961
      %1965 = vset.pattern.permute.xlu0 0
      %1966 = vperm.xlu0 %1965, %v1872
      %v1967 = vpop.permute.xlu0 %1966
      %1970 = vset.pattern.permute.xlu0 0
      %1971 = vperm.xlu0 %1970, %v1873
      %v1972 = vpop.permute.xlu0 %1971
      %1975 = vset.pattern.permute.xlu0 0
      %1976 = vperm.xlu0 %1975, %v1874
      %v1977 = vpop.permute.xlu0 %1976
      %1980 = vset.pattern.permute.xlu0 0
      %1981 = vperm.xlu0 %1980, %v1875
      %v1982 = vpop.permute.xlu0 %1981
      %1985 = vset.pattern.permute.xlu0 0
      %1986 = vperm.xlu0 %1985, %v1876
      %v1987 = vpop.permute.xlu0 %1986
      %1990 = vset.pattern.permute.xlu0 0
      %1991 = vperm.xlu0 %1990, %v1877
      %v1992 = vpop.permute.xlu0 %1991
      %1995 = vset.pattern.permute.xlu0 0
      %1996 = vperm.xlu0 %1995, %v1878
      %v1997 = vpop.permute.xlu0 %1996
      %2000 = vset.pattern.permute.xlu0 0
      %2001 = vperm.xlu0 %2000, %v1879
      %v2002 = vpop.permute.xlu0 %2001
      %2005 = vset.pattern.permute.xlu0 0
      %2006 = vperm.xlu0 %2005, %v1880
      %v2007 = vpop.permute.xlu0 %2006
      %2010 = vset.pattern.permute.xlu0 0
      %2011 = vperm.xlu0 %2010, %v1881
      %v2012 = vpop.permute.xlu0 %2011
      %2015 = vset.pattern.permute.xlu0 0
      %2016 = vperm.xlu0 %2015, %v1882
      %v2017 = vpop.permute.xlu0 %2016
      %2020 = vset.pattern.permute.xlu0 0
      %2021 = vperm.xlu0 %2020, %v1883
      %v2022 = vpop.permute.xlu0 %2021
      %2025 = vset.pattern.permute.xlu0 0
      %2026 = vperm.xlu0 %2025, %v1884
      %v2027 = vpop.permute.xlu0 %2026
      %2030 = vset.pattern.permute.xlu0 0
      %2031 = vperm.xlu0 %2030, %v1885
      %v2032 = vpop.permute.xlu0 %2031
      %2035 = vset.pattern.permute.xlu0 0
      %2036 = vperm.xlu0 %2035, %v1886
      %v2037 = vpop.permute.xlu0 %2036
      %2040 = vset.pattern.permute.xlu0 0
      %2041 = vperm.xlu0 %2040, %v1887
      %v2042 = vpop.permute.xlu0 %2041
      %2045 = vset.pattern.permute.xlu0 0
      %2046 = vperm.xlu0 %2045, %v1888
      %v2047 = vpop.permute.xlu0 %2046
      %v2049 = vmul.f32 %v1892, %v1561
      %v2050 = vmul.f32 %v1897, %v1562
      %v2051 = vmul.f32 %v1902, %v1563
      %v2052 = vmul.f32 %v1907, %v1564
      %v2053 = vmul.f32 %v1912, %v1565
      %v2054 = vmul.f32 %v1917, %v1566
      %v2055 = vmul.f32 %v1922, %v1567
      %v2056 = vmul.f32 %v1927, %v1568
      %v2057 = vmul.f32 %v1932, %v1569
      %v2058 = vmul.f32 %v1937, %v1570
      %v2059 = vmul.f32 %v1942, %v1571
      %v2060 = vmul.f32 %v1947, %v1572
      %v2061 = vmul.f32 %v1952, %v1573
      %v2062 = vmul.f32 %v1957, %v1574
      %v2063 = vmul.f32 %v1962, %v1575
      %v2064 = vmul.f32 %v1967, %v1576
      %v2065 = vmul.f32 %v1972, %v1577
      %v2066 = vmul.f32 %v1977, %v1578
      %v2067 = vmul.f32 %v1982, %v1579
      %v2068 = vmul.f32 %v1987, %v1580
      %v2069 = vmul.f32 %v1992, %v1581
      %v2070 = vmul.f32 %v1997, %v1582
      %v2071 = vmul.f32 %v2002, %v1583
      %v2072 = vmul.f32 %v2007, %v1584
      %v2073 = vmul.f32 %v2012, %v1585
      %v2074 = vmul.f32 %v2017, %v1586
      %v2075 = vmul.f32 %v2022, %v1587
      %v2076 = vmul.f32 %v2027, %v1588
      %v2077 = vmul.f32 %v2032, %v1589
      %v2078 = vmul.f32 %v2037, %v1590
      %v2079 = vmul.f32 %v2042, %v1591
      %v2080 = vmul.f32 %v2047, %v1592
      %2113 = vrot.lane.b32.xlu0 %v2049, 8
      %v2114 = vpop.permute.xlu0 %2113
      %2115 = vrot.lane.b32.xlu0 %v2050, 8
      %v2116 = vpop.permute.xlu0 %2115
      %2117 = vrot.lane.b32.xlu0 %v2051, 8
      %v2118 = vpop.permute.xlu0 %2117
      %2119 = vrot.lane.b32.xlu0 %v2052, 8
      %v2120 = vpop.permute.xlu0 %2119
      %2121 = vrot.lane.b32.xlu0 %v2053, 8
      %v2122 = vpop.permute.xlu0 %2121
      %2123 = vrot.lane.b32.xlu0 %v2054, 8
      %v2124 = vpop.permute.xlu0 %2123
      %2125 = vrot.lane.b32.xlu0 %v2055, 8
      %v2126 = vpop.permute.xlu0 %2125
      %2127 = vrot.lane.b32.xlu0 %v2056, 8
      %v2128 = vpop.permute.xlu0 %2127
      %2129 = vrot.lane.b32.xlu0 %v2057, 8
      %v2130 = vpop.permute.xlu0 %2129
      %2131 = vrot.lane.b32.xlu0 %v2058, 8
      %v2132 = vpop.permute.xlu0 %2131
      %2133 = vrot.lane.b32.xlu0 %v2059, 8
      %v2134 = vpop.permute.xlu0 %2133
      %2135 = vrot.lane.b32.xlu0 %v2060, 8
      %v2136 = vpop.permute.xlu0 %2135
      %2137 = vrot.lane.b32.xlu0 %v2061, 8
      %v2138 = vpop.permute.xlu0 %2137
      %2139 = vrot.lane.b32.xlu0 %v2062, 8
      %v2140 = vpop.permute.xlu0 %2139
      %2141 = vrot.lane.b32.xlu0 %v2063, 8
      %v2142 = vpop.permute.xlu0 %2141
      %2143 = vrot.lane.b32.xlu0 %v2064, 8
      %v2144 = vpop.permute.xlu0 %2143
      %2145 = vrot.lane.b32.xlu0 %v2065, 8
      %v2146 = vpop.permute.xlu0 %2145
      %2147 = vrot.lane.b32.xlu0 %v2066, 8
      %v2148 = vpop.permute.xlu0 %2147
      %2149 = vrot.lane.b32.xlu0 %v2067, 8
      %v2150 = vpop.permute.xlu0 %2149
      %2151 = vrot.lane.b32.xlu0 %v2068, 8
      %v2152 = vpop.permute.xlu0 %2151
      %2153 = vrot.lane.b32.xlu0 %v2069, 8
      %v2154 = vpop.permute.xlu0 %2153
      %2155 = vrot.lane.b32.xlu0 %v2070, 8
      %v2156 = vpop.permute.xlu0 %2155
      %2157 = vrot.lane.b32.xlu0 %v2071, 8
      %v2158 = vpop.permute.xlu0 %2157
      %2159 = vrot.lane.b32.xlu0 %v2072, 8
      %v2160 = vpop.permute.xlu0 %2159
      %2161 = vrot.lane.b32.xlu0 %v2073, 8
      %v2162 = vpop.permute.xlu0 %2161
      %2163 = vrot.lane.b32.xlu0 %v2074, 8
      %v2164 = vpop.permute.xlu0 %2163
      %2165 = vrot.lane.b32.xlu0 %v2075, 8
      %v2166 = vpop.permute.xlu0 %2165
      %2167 = vrot.lane.b32.xlu0 %v2076, 8
      %v2168 = vpop.permute.xlu0 %2167
      %2169 = vrot.lane.b32.xlu0 %v2077, 8
      %v2170 = vpop.permute.xlu0 %2169
      %2171 = vrot.lane.b32.xlu0 %v2078, 8
      %v2172 = vpop.permute.xlu0 %2171
      %2173 = vrot.lane.b32.xlu0 %v2079, 8
      %v2174 = vpop.permute.xlu0 %2173
      %2175 = vrot.lane.b32.xlu0 %v2080, 8
      %v2176 = vpop.permute.xlu0 %2175
      %v2209 = vadd.f32 %v1693, %v2114
      %v2210 = vadd.f32 %v1694, %v2116
      %v2211 = vadd.f32 %v1695, %v2118
      %v2212 = vadd.f32 %v1696, %v2120
      %v2213 = vadd.f32 %v1697, %v2122
      %v2214 = vadd.f32 %v1698, %v2124
      %v2215 = vadd.f32 %v1699, %v2126
      %v2216 = vadd.f32 %v1700, %v2128
      %v2217 = vadd.f32 %v1701, %v2130
      %v2218 = vadd.f32 %v1702, %v2132
      %v2219 = vadd.f32 %v1703, %v2134
      %v2220 = vadd.f32 %v1704, %v2136
      %v2221 = vadd.f32 %v1705, %v2138
      %v2222 = vadd.f32 %v1706, %v2140
      %v2223 = vadd.f32 %v1707, %v2142
      %v2224 = vadd.f32 %v1708, %v2144
      %v2225 = vadd.f32 %v1709, %v2146
      %v2226 = vadd.f32 %v1710, %v2148
      %v2227 = vadd.f32 %v1711, %v2150
      %v2228 = vadd.f32 %v1712, %v2152
      %v2229 = vadd.f32 %v1713, %v2154
      %v2230 = vadd.f32 %v1714, %v2156
      %v2231 = vadd.f32 %v1715, %v2158
      %v2232 = vadd.f32 %v1716, %v2160
      %v2233 = vadd.f32 %v1717, %v2162
      %v2234 = vadd.f32 %v1718, %v2164
      %v2235 = vadd.f32 %v1719, %v2166
      %v2236 = vadd.f32 %v1720, %v2168
      %v2237 = vadd.f32 %v1721, %v2170
      %v2238 = vadd.f32 %v1722, %v2172
      %v2239 = vadd.f32 %v1723, %v2174
      %v2240 = vadd.f32 %v1724, %v2176
      %v2241 = vld [vmem:[%s7] sm:$0xff]
      %v2242 = vld [vmem:[%s7 + $0x8] sm:$0xff]
      %v2243 = vld [vmem:[%s7 + $0x10] sm:$0xff]
      %v2244 = vld [vmem:[%s7 + $0x18] sm:$0xff]
      %v2245 = vld [vmem:[%s7 + $0x20] sm:$0xff]
      %v2246 = vld [vmem:[%s7 + $0x28] sm:$0xff]
      %v2247 = vld [vmem:[%s7 + $0x30] sm:$0xff]
      %v2248 = vld [vmem:[%s7 + $0x38] sm:$0xff]
      %v2249 = vld [vmem:[%s7 + $0x40] sm:$0xff]
      %v2250 = vld [vmem:[%s7 + $0x48] sm:$0xff]
      %v2251 = vld [vmem:[%s7 + $0x50] sm:$0xff]
      %v2252 = vld [vmem:[%s7 + $0x58] sm:$0xff]
      %v2253 = vld [vmem:[%s7 + $0x60] sm:$0xff]
      %v2254 = vld [vmem:[%s7 + $0x68] sm:$0xff]
      %v2255 = vld [vmem:[%s7 + $0x70] sm:$0xff]
      %v2256 = vld [vmem:[%s7 + $0x78] sm:$0xff]
      %v2257 = vld [vmem:[%s7 + $0x80] sm:$0xff]
      %v2258 = vld [vmem:[%s7 + $0x88] sm:$0xff]
      %v2259 = vld [vmem:[%s7 + $0x90] sm:$0xff]
      %v2260 = vld [vmem:[%s7 + $0x98] sm:$0xff]
      %v2261 = vld [vmem:[%s7 + $0xa0] sm:$0xff]
      %v2262 = vld [vmem:[%s7 + $0xa8] sm:$0xff]
      %v2263 = vld [vmem:[%s7 + $0xb0] sm:$0xff]
      %v2264 = vld [vmem:[%s7 + $0xb8] sm:$0xff]
      %v2265 = vld [vmem:[%s7 + $0xc0] sm:$0xff]
      %v2266 = vld [vmem:[%s7 + $0xc8] sm:$0xff]
      %v2267 = vld [vmem:[%s7 + $0xd0] sm:$0xff]
      %v2268 = vld [vmem:[%s7 + $0xd8] sm:$0xff]
      %v2269 = vld [vmem:[%s7 + $0xe0] sm:$0xff]
      %v2270 = vld [vmem:[%s7 + $0xe8] sm:$0xff]
      %v2271 = vld [vmem:[%s7 + $0xf0] sm:$0xff]
      %v2272 = vld [vmem:[%s7 + $0xf8] sm:$0xff]
      %2274 = vset.pattern.permute.xlu0 0
      %2275 = vperm.xlu0 %2274, %v2241
      %v2276 = vpop.permute.xlu0 %2275
      %2279 = vset.pattern.permute.xlu0 0
      %2280 = vperm.xlu0 %2279, %v2242
      %v2281 = vpop.permute.xlu0 %2280
      %2284 = vset.pattern.permute.xlu0 0
      %2285 = vperm.xlu0 %2284, %v2243
      %v2286 = vpop.permute.xlu0 %2285
      %2289 = vset.pattern.permute.xlu0 0
      %2290 = vperm.xlu0 %2289, %v2244
      %v2291 = vpop.permute.xlu0 %2290
      %2294 = vset.pattern.permute.xlu0 0
      %2295 = vperm.xlu0 %2294, %v2245
      %v2296 = vpop.permute.xlu0 %2295
      %2299 = vset.pattern.permute.xlu0 0
      %2300 = vperm.xlu0 %2299, %v2246
      %v2301 = vpop.permute.xlu0 %2300
      %2304 = vset.pattern.permute.xlu0 0
      %2305 = vperm.xlu0 %2304, %v2247
      %v2306 = vpop.permute.xlu0 %2305
      %2309 = vset.pattern.permute.xlu0 0
      %2310 = vperm.xlu0 %2309, %v2248
      %v2311 = vpop.permute.xlu0 %2310
      %2314 = vset.pattern.permute.xlu0 0
      %2315 = vperm.xlu0 %2314, %v2249
      %v2316 = vpop.permute.xlu0 %2315
      %2319 = vset.pattern.permute.xlu0 0
      %2320 = vperm.xlu0 %2319, %v2250
      %v2321 = vpop.permute.xlu0 %2320
      %2324 = vset.pattern.permute.xlu0 0
      %2325 = vperm.xlu0 %2324, %v2251
      %v2326 = vpop.permute.xlu0 %2325
      %2329 = vset.pattern.permute.xlu0 0
      %2330 = vperm.xlu0 %2329, %v2252
      %v2331 = vpop.permute.xlu0 %2330
      %2334 = vset.pattern.permute.xlu0 0
      %2335 = vperm.xlu0 %2334, %v2253
      %v2336 = vpop.permute.xlu0 %2335
      %2339 = vset.pattern.permute.xlu0 0
      %2340 = vperm.xlu0 %2339, %v2254
      %v2341 = vpop.permute.xlu0 %2340
      %2344 = vset.pattern.permute.xlu0 0
      %2345 = vperm.xlu0 %2344, %v2255
      %v2346 = vpop.permute.xlu0 %2345
      %2349 = vset.pattern.permute.xlu0 0
      %2350 = vperm.xlu0 %2349, %v2256
      %v2351 = vpop.permute.xlu0 %2350
      %2354 = vset.pattern.permute.xlu0 0
      %2355 = vperm.xlu0 %2354, %v2257
      %v2356 = vpop.permute.xlu0 %2355
      %2359 = vset.pattern.permute.xlu0 0
      %2360 = vperm.xlu0 %2359, %v2258
      %v2361 = vpop.permute.xlu0 %2360
      %2364 = vset.pattern.permute.xlu0 0
      %2365 = vperm.xlu0 %2364, %v2259
      %v2366 = vpop.permute.xlu0 %2365
      %2369 = vset.pattern.permute.xlu0 0
      %2370 = vperm.xlu0 %2369, %v2260
      %v2371 = vpop.permute.xlu0 %2370
      %2374 = vset.pattern.permute.xlu0 0
      %2375 = vperm.xlu0 %2374, %v2261
      %v2376 = vpop.permute.xlu0 %2375
      %2379 = vset.pattern.permute.xlu0 0
      %2380 = vperm.xlu0 %2379, %v2262
      %v2381 = vpop.permute.xlu0 %2380
      %2384 = vset.pattern.permute.xlu0 0
      %2385 = vperm.xlu0 %2384, %v2263
      %v2386 = vpop.permute.xlu0 %2385
      %2389 = vset.pattern.permute.xlu0 0
      %2390 = vperm.xlu0 %2389, %v2264
      %v2391 = vpop.permute.xlu0 %2390
      %2394 = vset.pattern.permute.xlu0 0
      %2395 = vperm.xlu0 %2394, %v2265
      %v2396 = vpop.permute.xlu0 %2395
      %2399 = vset.pattern.permute.xlu0 0
      %2400 = vperm.xlu0 %2399, %v2266
      %v2401 = vpop.permute.xlu0 %2400
      %2404 = vset.pattern.permute.xlu0 0
      %2405 = vperm.xlu0 %2404, %v2267
      %v2406 = vpop.permute.xlu0 %2405
      %2409 = vset.pattern.permute.xlu0 0
      %2410 = vperm.xlu0 %2409, %v2268
      %v2411 = vpop.permute.xlu0 %2410
      %2414 = vset.pattern.permute.xlu0 0
      %2415 = vperm.xlu0 %2414, %v2269
      %v2416 = vpop.permute.xlu0 %2415
      %2419 = vset.pattern.permute.xlu0 0
      %2420 = vperm.xlu0 %2419, %v2270
      %v2421 = vpop.permute.xlu0 %2420
      %2424 = vset.pattern.permute.xlu0 0
      %2425 = vperm.xlu0 %2424, %v2271
      %v2426 = vpop.permute.xlu0 %2425
      %2429 = vset.pattern.permute.xlu0 0
      %2430 = vperm.xlu0 %2429, %v2272
      %v2431 = vpop.permute.xlu0 %2430
      %v2433 = vmul.f32 %v2276, %v1825
      %v2434 = vmul.f32 %v2281, %v1826
      %v2435 = vmul.f32 %v2286, %v1827
      %v2436 = vmul.f32 %v2291, %v1828
      %v2437 = vmul.f32 %v2296, %v1829
      %v2438 = vmul.f32 %v2301, %v1830
      %v2439 = vmul.f32 %v2306, %v1831
      %v2440 = vmul.f32 %v2311, %v1832
      %v2441 = vmul.f32 %v2316, %v1833
      %v2442 = vmul.f32 %v2321, %v1834
      %v2443 = vmul.f32 %v2326, %v1835
      %v2444 = vmul.f32 %v2331, %v1836
      %v2445 = vmul.f32 %v2336, %v1837
      %v2446 = vmul.f32 %v2341, %v1838
      %v2447 = vmul.f32 %v2346, %v1839
      %v2448 = vmul.f32 %v2351, %v1840
      %v2449 = vmul.f32 %v2356, %v1841
      %v2450 = vmul.f32 %v2361, %v1842
      %v2451 = vmul.f32 %v2366, %v1843
      %v2452 = vmul.f32 %v2371, %v1844
      %v2453 = vmul.f32 %v2376, %v1845
      %v2454 = vmul.f32 %v2381, %v1846
      %v2455 = vmul.f32 %v2386, %v1847
      %v2456 = vmul.f32 %v2391, %v1848
      %v2457 = vmul.f32 %v2396, %v1849
      %v2458 = vmul.f32 %v2401, %v1850
      %v2459 = vmul.f32 %v2406, %v1851
      %v2460 = vmul.f32 %v2411, %v1852
      %v2461 = vmul.f32 %v2416, %v1853
      %v2462 = vmul.f32 %v2421, %v1854
      %v2463 = vmul.f32 %v2426, %v1855
      %v2464 = vmul.f32 %v2431, %v1856
      %2497 = vrot.lane.b32.xlu0 %v2433, 120
      %v2498 = vpop.permute.xlu0 %2497
      %2499 = vrot.lane.b32.xlu0 %v2434, 120
      %v2500 = vpop.permute.xlu0 %2499
      %2501 = vrot.lane.b32.xlu0 %v2435, 120
      %v2502 = vpop.permute.xlu0 %2501
      %2503 = vrot.lane.b32.xlu0 %v2436, 120
      %v2504 = vpop.permute.xlu0 %2503
      %2505 = vrot.lane.b32.xlu0 %v2437, 120
      %v2506 = vpop.permute.xlu0 %2505
      %2507 = vrot.lane.b32.xlu0 %v2438, 120
      %v2508 = vpop.permute.xlu0 %2507
      %2509 = vrot.lane.b32.xlu0 %v2439, 120
      %v2510 = vpop.permute.xlu0 %2509
      %2511 = vrot.lane.b32.xlu0 %v2440, 120
      %v2512 = vpop.permute.xlu0 %2511
      %2513 = vrot.lane.b32.xlu0 %v2441, 120
      %v2514 = vpop.permute.xlu0 %2513
      %2515 = vrot.lane.b32.xlu0 %v2442, 120
      %v2516 = vpop.permute.xlu0 %2515
      %2517 = vrot.lane.b32.xlu0 %v2443, 120
      %v2518 = vpop.permute.xlu0 %2517
      %2519 = vrot.lane.b32.xlu0 %v2444, 120
      %v2520 = vpop.permute.xlu0 %2519
      %2521 = vrot.lane.b32.xlu0 %v2445, 120
      %v2522 = vpop.permute.xlu0 %2521
      %2523 = vrot.lane.b32.xlu0 %v2446, 120
      %v2524 = vpop.permute.xlu0 %2523
      %2525 = vrot.lane.b32.xlu0 %v2447, 120
      %v2526 = vpop.permute.xlu0 %2525
      %2527 = vrot.lane.b32.xlu0 %v2448, 120
      %v2528 = vpop.permute.xlu0 %2527
      %2529 = vrot.lane.b32.xlu0 %v2449, 120
      %v2530 = vpop.permute.xlu0 %2529
      %2531 = vrot.lane.b32.xlu0 %v2450, 120
      %v2532 = vpop.permute.xlu0 %2531
      %2533 = vrot.lane.b32.xlu0 %v2451, 120
      %v2534 = vpop.permute.xlu0 %2533
      %2535 = vrot.lane.b32.xlu0 %v2452, 120
      %v2536 = vpop.permute.xlu0 %2535
      %2537 = vrot.lane.b32.xlu0 %v2453, 120
      %v2538 = vpop.permute.xlu0 %2537
      %2539 = vrot.lane.b32.xlu0 %v2454, 120
      %v2540 = vpop.permute.xlu0 %2539
      %2541 = vrot.lane.b32.xlu0 %v2455, 120
      %v2542 = vpop.permute.xlu0 %2541
      %2543 = vrot.lane.b32.xlu0 %v2456, 120
      %v2544 = vpop.permute.xlu0 %2543
      %2545 = vrot.lane.b32.xlu0 %v2457, 120
      %v2546 = vpop.permute.xlu0 %2545
      %2547 = vrot.lane.b32.xlu0 %v2458, 120
      %v2548 = vpop.permute.xlu0 %2547
      %2549 = vrot.lane.b32.xlu0 %v2459, 120
      %v2550 = vpop.permute.xlu0 %2549
      %2551 = vrot.lane.b32.xlu0 %v2460, 120
      %v2552 = vpop.permute.xlu0 %2551
      %2553 = vrot.lane.b32.xlu0 %v2461, 120
      %v2554 = vpop.permute.xlu0 %2553
      %2555 = vrot.lane.b32.xlu0 %v2462, 120
      %v2556 = vpop.permute.xlu0 %2555
      %2557 = vrot.lane.b32.xlu0 %v2463, 120
      %v2558 = vpop.permute.xlu0 %2557
      %2559 = vrot.lane.b32.xlu0 %v2464, 120
      %v2560 = vpop.permute.xlu0 %2559
      %v2593 = vadd.f32 %v2209, %v2498
      %v2594 = vadd.f32 %v2210, %v2500
      %v2595 = vadd.f32 %v2211, %v2502
      %v2596 = vadd.f32 %v2212, %v2504
      %v2597 = vadd.f32 %v2213, %v2506
      %v2598 = vadd.f32 %v2214, %v2508
      %v2599 = vadd.f32 %v2215, %v2510
      %v2600 = vadd.f32 %v2216, %v2512
      %v2601 = vadd.f32 %v2217, %v2514
      %v2602 = vadd.f32 %v2218, %v2516
      %v2603 = vadd.f32 %v2219, %v2518
      %v2604 = vadd.f32 %v2220, %v2520
      %v2605 = vadd.f32 %v2221, %v2522
      %v2606 = vadd.f32 %v2222, %v2524
      %v2607 = vadd.f32 %v2223, %v2526
      %v2608 = vadd.f32 %v2224, %v2528
      %v2609 = vadd.f32 %v2225, %v2530
      %v2610 = vadd.f32 %v2226, %v2532
      %v2611 = vadd.f32 %v2227, %v2534
      %v2612 = vadd.f32 %v2228, %v2536
      %v2613 = vadd.f32 %v2229, %v2538
      %v2614 = vadd.f32 %v2230, %v2540
      %v2615 = vadd.f32 %v2231, %v2542
      %v2616 = vadd.f32 %v2232, %v2544
      %v2617 = vadd.f32 %v2233, %v2546
      %v2618 = vadd.f32 %v2234, %v2548
      %v2619 = vadd.f32 %v2235, %v2550
      %v2620 = vadd.f32 %v2236, %v2552
      %v2621 = vadd.f32 %v2237, %v2554
      %v2622 = vadd.f32 %v2238, %v2556
      %v2623 = vadd.f32 %v2239, %v2558
      %v2624 = vadd.f32 %v2240, %v2560
      %2657 = vrot.lane.b32.xlu0 %v2593, 124
      %v2658 = vpop.permute.xlu0 %2657
      %2659 = vrot.lane.b32.xlu0 %v2594, 124
      %v2660 = vpop.permute.xlu0 %2659
      %2661 = vrot.lane.b32.xlu0 %v2595, 124
      %v2662 = vpop.permute.xlu0 %2661
      %2663 = vrot.lane.b32.xlu0 %v2596, 124
      %v2664 = vpop.permute.xlu0 %2663
      %2665 = vrot.lane.b32.xlu0 %v2597, 124
      %v2666 = vpop.permute.xlu0 %2665
      %2667 = vrot.lane.b32.xlu0 %v2598, 124
      %v2668 = vpop.permute.xlu0 %2667
      %2669 = vrot.lane.b32.xlu0 %v2599, 124
      %v2670 = vpop.permute.xlu0 %2669
      %2671 = vrot.lane.b32.xlu0 %v2600, 124
      %v2672 = vpop.permute.xlu0 %2671
      %2673 = vrot.lane.b32.xlu0 %v2601, 124
      %v2674 = vpop.permute.xlu0 %2673
      %2675 = vrot.lane.b32.xlu0 %v2602, 124
      %v2676 = vpop.permute.xlu0 %2675
      %2677 = vrot.lane.b32.xlu0 %v2603, 124
      %v2678 = vpop.permute.xlu0 %2677
      %2679 = vrot.lane.b32.xlu0 %v2604, 124
      %v2680 = vpop.permute.xlu0 %2679
      %2681 = vrot.lane.b32.xlu0 %v2605, 124
      %v2682 = vpop.permute.xlu0 %2681
      %2683 = vrot.lane.b32.xlu0 %v2606, 124
      %v2684 = vpop.permute.xlu0 %2683
      %2685 = vrot.lane.b32.xlu0 %v2607, 124
      %v2686 = vpop.permute.xlu0 %2685
      %2687 = vrot.lane.b32.xlu0 %v2608, 124
      %v2688 = vpop.permute.xlu0 %2687
      %2689 = vrot.lane.b32.xlu0 %v2609, 124
      %v2690 = vpop.permute.xlu0 %2689
      %2691 = vrot.lane.b32.xlu0 %v2610, 124
      %v2692 = vpop.permute.xlu0 %2691
      %2693 = vrot.lane.b32.xlu0 %v2611, 124
      %v2694 = vpop.permute.xlu0 %2693
      %2695 = vrot.lane.b32.xlu0 %v2612, 124
      %v2696 = vpop.permute.xlu0 %2695
      %2697 = vrot.lane.b32.xlu0 %v2613, 124
      %v2698 = vpop.permute.xlu0 %2697
      %2699 = vrot.lane.b32.xlu0 %v2614, 124
      %v2700 = vpop.permute.xlu0 %2699
      %2701 = vrot.lane.b32.xlu0 %v2615, 124
      %v2702 = vpop.permute.xlu0 %2701
      %2703 = vrot.lane.b32.xlu0 %v2616, 124
      %v2704 = vpop.permute.xlu0 %2703
      %2705 = vrot.lane.b32.xlu0 %v2617, 124
      %v2706 = vpop.permute.xlu0 %2705
      %2707 = vrot.lane.b32.xlu0 %v2618, 124
      %v2708 = vpop.permute.xlu0 %2707
      %2709 = vrot.lane.b32.xlu0 %v2619, 124
      %v2710 = vpop.permute.xlu0 %2709
      %2711 = vrot.lane.b32.xlu0 %v2620, 124
      %v2712 = vpop.permute.xlu0 %2711
      %2713 = vrot.lane.b32.xlu0 %v2621, 124
      %v2714 = vpop.permute.xlu0 %2713
      %2715 = vrot.lane.b32.xlu0 %v2622, 124
      %v2716 = vpop.permute.xlu0 %2715
      %2717 = vrot.lane.b32.xlu0 %v2623, 124
      %v2718 = vpop.permute.xlu0 %2717
      %2719 = vrot.lane.b32.xlu0 %v2624, 124
      %v2720 = vpop.permute.xlu0 %2719
      %vm2753 = vcmask 97312
      %2754 = vst.msk [vmem:[%s305] sm:$0xff] %vm2753, %v2658
      %2755 = vst.msk [vmem:[%s305 + $0x8] sm:$0xff] %vm2753, %v2660
      %2756 = vst.msk [vmem:[%s305 + $0x10] sm:$0xff] %vm2753, %v2662
      %2757 = vst.msk [vmem:[%s305 + $0x18] sm:$0xff] %vm2753, %v2664
      %2758 = vst.msk [vmem:[%s305 + $0x20] sm:$0xff] %vm2753, %v2666
      %2759 = vst.msk [vmem:[%s305 + $0x28] sm:$0xff] %vm2753, %v2668
      %2760 = vst.msk [vmem:[%s305 + $0x30] sm:$0xff] %vm2753, %v2670
      %2761 = vst.msk [vmem:[%s305 + $0x38] sm:$0xff] %vm2753, %v2672
      %2762 = vst.msk [vmem:[%s305 + $0x40] sm:$0xff] %vm2753, %v2674
      %2763 = vst.msk [vmem:[%s305 + $0x48] sm:$0xff] %vm2753, %v2676
      %2764 = vst.msk [vmem:[%s305 + $0x50] sm:$0xff] %vm2753, %v2678
      %2765 = vst.msk [vmem:[%s305 + $0x58] sm:$0xff] %vm2753, %v2680
      %2766 = vst.msk [vmem:[%s305 + $0x60] sm:$0xff] %vm2753, %v2682
      %2767 = vst.msk [vmem:[%s305 + $0x68] sm:$0xff] %vm2753, %v2684
      %2768 = vst.msk [vmem:[%s305 + $0x70] sm:$0xff] %vm2753, %v2686
      %2769 = vst.msk [vmem:[%s305 + $0x78] sm:$0xff] %vm2753, %v2688
      %2770 = vst.msk [vmem:[%s305 + $0x80] sm:$0xff] %vm2753, %v2690
      %2771 = vst.msk [vmem:[%s305 + $0x88] sm:$0xff] %vm2753, %v2692
      %2772 = vst.msk [vmem:[%s305 + $0x90] sm:$0xff] %vm2753, %v2694
      %2773 = vst.msk [vmem:[%s305 + $0x98] sm:$0xff] %vm2753, %v2696
      %2774 = vst.msk [vmem:[%s305 + $0xa0] sm:$0xff] %vm2753, %v2698
      %2775 = vst.msk [vmem:[%s305 + $0xa8] sm:$0xff] %vm2753, %v2700
      %2776 = vst.msk [vmem:[%s305 + $0xb0] sm:$0xff] %vm2753, %v2702
      %2777 = vst.msk [vmem:[%s305 + $0xb8] sm:$0xff] %vm2753, %v2704
      %2778 = vst.msk [vmem:[%s305 + $0xc0] sm:$0xff] %vm2753, %v2706
      %2779 = vst.msk [vmem:[%s305 + $0xc8] sm:$0xff] %vm2753, %v2708
      %2780 = vst.msk [vmem:[%s305 + $0xd0] sm:$0xff] %vm2753, %v2710
      %2781 = vst.msk [vmem:[%s305 + $0xd8] sm:$0xff] %vm2753, %v2712
      %2782 = vst.msk [vmem:[%s305 + $0xe0] sm:$0xff] %vm2753, %v2714
      %2783 = vst.msk [vmem:[%s305 + $0xe8] sm:$0xff] %vm2753, %v2716
      %2784 = vst.msk [vmem:[%s305 + $0xf0] sm:$0xff] %vm2753, %v2718
      %2785 = vst.msk [vmem:[%s305 + $0xf8] sm:$0xff] %vm2753, %v2720
      %p2786 = scmp.lt.s32.totalorder %s19, 1
      %s2787 = scalar_select %p2786, %s19, 1
      %s2788 = smul.addr %s2787, 32
      %s2789 = smul.addr %s2788, 8
      %s2790 = scalar_lea.vmem %s8, %s2789
      // Predicated region
      $region53: #{dense_layer_forward.1} parent=51 // pred_check
        %p2791 = pneg %p210
      $region54: #{dense_layer_forward.1} parent=51 // pred_check_branch
        %2793 = sbr.rel (%p2791) target = $region56
      $region55: #{dense_layer_forward.1} parent=51 // pred_region
        _
      $region56: #{dense_layer_forward.1} parent=51 // pred_fallthru
        _
    $region52: #{dense_layer_forward.1} parent=5 // pred_fallthru
      _
    %p2794 = scmp.le.s32.totalorder 2, %s14
    // Predicated region
    $region57: #{dense_layer_forward.1} parent=5 // pred_check
      %p2795 = pneg %p2794
    $region58: #{dense_layer_forward.1} parent=5 // pred_check_branch
      %2797 = sbr.rel (%p2795) target = $region60
    $region59: #{dense_layer_forward.1} parent=5 // pred_region
      %s2798 = ssub.s32 %s14, 2
      // Predicated region
      $region61: #{dense_layer_forward.1} parent=59 // pred_check
        %p2799 = pneg %p216
      $region62: #{dense_layer_forward.1} parent=59 // pred_check_branch
        %2801 = sbr.rel (%p2799) target = $region64
      $region63: #{dense_layer_forward.1} parent=59 // pred_region
        %p2802 = scmp.lt.s32.totalorder %s20, 1
        %s2803 = scalar_select %p2802, %s20, 1
        %s2804 = smul.addr %s2803, 32
        %s2805 = smul.addr %s2804, 8
        %s2806 = scalar_lea.vmem %s8, %s2805
      $region64: #{dense_layer_forward.1} parent=59 // pred_fallthru
        _
    $region60: #{dense_layer_forward.1} parent=5 // pred_fallthru
      _
  $region6: #{dense_layer_forward.1} parent=0 // loop_footer
    %s18 = sadd.s32 1, %s14
  $region7: #{dense_layer_forward.1} parent=0 // loop_footer_branch
    %13 = sbr.rel target = $region3
  $region8: #{dense_layer_forward.1} parent=0 // loop_exit
    _

</llo_original>
